<compile_context>
chip_gen: v5e
topology: v5e:2x2
jax: 0.10.0
libtpu: 0.0.40
codegen_flags: <defaults>
</compile_context>

<pallas_src>
import functools

import jax
import jax.numpy as jnp
from jax.experimental import pallas as pl
from jax.experimental.pallas import tpu as pltpu

INPUT_SIZE = 143
HIDDEN_SIZE = 320
NUM_CLASSES = 1


def _mlp_kernel(x_ref, w1_ref, b1_ref, w2_ref, b2_ref, o_ref, *, bf16_epilogue):
    # fc1 on the MXU: bf16 x bf16 -> f32 accumulate.  astype is a no-op when
    # the caller already streams bf16 x.
    h = jnp.dot(x_ref[...].astype(jnp.bfloat16), w1_ref[...],
                preferred_element_type=jnp.float32)            # (tm, hidden) f32
    h = jnp.maximum(h + b1_ref[...], 0.0)                      # bias + ReLU (f32)
    # fc2 (num_classes == 1): VPU multiply + cross-lane reduce; avoids an MXU
    # matmul whose N=1 output would be padded to a full 128/256-lane tile.
    if bf16_epilogue:
        # v6e/v7x: bf16 VPU multiply halves VALU passes / vreg pressure over
        # the (tm, hidden) tensor; the reduce accumulates in f32 for accuracy.
        prods = h.astype(jnp.bfloat16) * w2_ref[...].astype(jnp.bfloat16)
        acts = jnp.sum(prods, axis=-1, dtype=jnp.float32) + b2_ref[0]   # (tm,)
    else:
        # v5e: no bf16 VPU -> stay in f32.
        acts = jnp.sum(h * w2_ref[...], axis=-1) + b2_ref[0]            # (tm,)
    # Lane-dense store: (tm,) -> (1, tm); the relayout rides the XLU slot.
    o_ref[...] = acts.reshape(1, -1).astype(o_ref.dtype)


def prepare_params(w1, b1, w2, b2):
    """One-time glue (outside the jitted forward): PyTorch Linear layouts ->
    kernel layouts.  w1:(hidden,in) -> bf16 (in,hidden); biases made 2-D/1-D."""
    assert w2.shape[0] == 1, "fc2 reduce path assumes num_classes == 1"
    w1_t = jnp.asarray(w1, jnp.float32).T.astype(jnp.bfloat16)   # (in, hidden) bf16
    b1_2d = jnp.asarray(b1, jnp.float32).reshape(1, -1)          # (1, hidden) f32
    w2_row = jnp.asarray(w2, jnp.float32).reshape(1, -1)         # (1, hidden) f32
    b2_1d = jnp.asarray(b2, jnp.float32).reshape(-1)             # (1,)  f32 (SMEM)
    return w1_t, b1_2d, w2_row, b2_1d


def _device_defaults():
    """Per-generation (tm, bf16_epilogue) defaults."""
    try:
        kind = jax.devices()[0].device_kind.lower()
    except Exception:  # pragma: no cover - defensive
        kind = ""
    if "v5" in kind:
        return 8192, False   # 128 MiB VMEM, no bf16 VPU
    if "v6" in kind:
        return 8192, True    # 128 MiB VMEM, bf16 VPU
    # v7x / unknown: 64 MiB VMEM per TC -> cap the row tile; bf16 VPU present.
    return 4096, True


@functools.partial(jax.jit, static_argnames=("tm", "bf16_epilogue"))
def _net_forward_impl(x, w1_t, b1_2d, w2_row, b2_1d, *, tm, bf16_epilogue):
    n, in_dim = x.shape
    hidden = w1_t.shape[1]
    assert tm % 128 == 0
    assert w1_t.shape == (in_dim, hidden)
    assert b1_2d.shape == (1, hidden)
    assert w2_row.shape == (1, hidden) and b2_1d.shape == (1,)

    grid = (pl.cdiv(n, tm),)  # ragged last tile handled by Pallas boundary masking
    # Larger tiles on v5e/v6e need more scoped VMEM headroom; keep v7x modest.
    vmem_limit = (96 if tm >= 8192 else 48) * 1024 * 1024

    out = pl.pallas_call(
        functools.partial(_mlp_kernel, bf16_epilogue=bf16_epilogue),
        out_shape=jax.ShapeDtypeStruct((1, n), jnp.float32),
        grid_spec=pltpu.PrefetchScalarGridSpec(
            num_scalar_prefetch=0,
            grid=grid,
            in_specs=[
                pl.BlockSpec((tm, in_dim), lambda i: (i, 0)),        # x row tile
                pl.BlockSpec((in_dim, hidden), lambda i: (0, 0)),    # w1.T (bf16, resident)
                pl.BlockSpec((1, hidden), lambda i: (0, 0)),         # b1 (f32)
                pl.BlockSpec((1, hidden), lambda i: (0, 0)),         # w2 row (f32)
                pl.BlockSpec(memory_space=pltpu.MemorySpace.SMEM),   # b2 scalar
            ],
            out_specs=pl.BlockSpec((1, tm), lambda i: (0, i)),       # lane-dense out
        ),
        compiler_params=pltpu.CompilerParams(
            dimension_semantics=("parallel",),   # shards the grid across v7x's 2 TCs
            vmem_limit_bytes=vmem_limit,
        ),
    )(x, w1_t, b1_2d, w2_row, b2_1d)
    return out.reshape(n, 1)


def net_forward(x, w1_t, b1_2d, w2_row, b2_1d, *, tm=None, bf16_epilogue=None):
    """relu(x @ w1.T + b1) @ w2.T + b2  (PyTorch Linear semantics).

    x may be float32 or bfloat16 (bf16 halves the dominant HBM stream on v6e).
    tm / bf16_epilogue default per TPU generation (8192/f32-epilogue on v5e,
    8192/bf16 on v6e, 4096/bf16 on v7x or unknown chips).
    """
    d_tm, d_ep = _device_defaults()
    tm = d_tm if tm is None else tm
    bf16_epilogue = d_ep if bf16_epilogue is None else bf16_epilogue
    return _net_forward_impl(x, w1_t, b1_2d, w2_row, b2_1d,
                             tm=tm, bf16_epilogue=bf16_epilogue)


def init_params(key, input_size, hidden_size, num_classes):
    """Deterministic PyTorch-style (uniform +/- 1/sqrt(fan_in)) init."""
    k1, k2, k3, k4 = jax.random.split(key, 4)
    lim1 = 1.0 / jnp.sqrt(jnp.float32(input_size))
    lim2 = 1.0 / jnp.sqrt(jnp.float32(hidden_size))
    w1 = jax.random.uniform(k1, (hidden_size, input_size), jnp.float32, -lim1, lim1)
    b1 = jax.random.uniform(k2, (hidden_size,), jnp.float32, -lim1, lim1)
    w2 = jax.random.uniform(k3, (num_classes, hidden_size), jnp.float32, -lim2, lim2)
    b2 = jax.random.uniform(k4, (num_classes,), jnp.float32, -lim2, lim2)
    return w1, b1, w2, b2


if __name__ == "__main__":
    key = jax.random.PRNGKey(0)
    kx, kp = jax.random.split(key)

    batch = 300  # deliberately NOT tile aligned (real workload is 150000 rows)
    x = jax.random.normal(kx, (batch, INPUT_SIZE), jnp.float32)
    w1, b1, w2, b2 = init_params(kp, INPUT_SIZE, HIDDEN_SIZE, NUM_CLASSES)

    params = prepare_params(w1, b1, w2, b2)     # one-time layout/dtype glue

    # Small tiles for the small demo batch; production tm defaults per chip
    # (8192 on v5e/v6e, 4096 on v7x).
    out_f32 = jax.block_until_ready(net_forward(x, *params, tm=256))
    out_bf16 = jax.block_until_ready(
        net_forward(x.astype(jnp.bfloat16), *params, tm=128))
    # Also exercise the non-default epilogue path for coverage.
    out_alt = jax.block_until_ready(
        net_forward(x, *params, tm=256,
                    bf16_epilogue=not _device_defaults()[1]))

    # Pure-JAX f32 reference of the PyTorch forward semantics.
    ref = jnp.maximum(x @ w1.T + b1, 0.0) @ w2.T + b2
    assert out_f32.shape == (batch, NUM_CLASSES)
    # bf16 weights (+ optional bf16 x / bf16 epilogue) => loose tolerance.
    assert jnp.allclose(out_f32, ref, atol=5e-2, rtol=5e-2)
    assert jnp.allclose(out_bf16, ref, atol=5e-2, rtol=5e-2)
    assert jnp.allclose(out_alt, ref, atol=5e-2, rtol=5e-2)

    print("KERNEL_OK")
</pallas_src>

<mosaic_0001>
module attributes {stable_mosaic.version = 11 : i64} {
  func.func @_mlp_kernel(%arg0: i32, %arg1: memref<256x143xf32, #tpu.memory_space<vmem>>, %arg2: memref<143x320xbf16, #tpu.memory_space<vmem>>, %arg3: memref<1x320xf32, #tpu.memory_space<vmem>>, %arg4: memref<1x320xf32, #tpu.memory_space<vmem>>, %arg5: memref<1xf32, #tpu.memory_space<smem>>, %arg6: memref<1x256xf32, #tpu.memory_space<vmem>>) attributes {dimension_semantics = [#tpu.dimension_semantics<parallel>], iteration_bounds = array<i64: 2>, scalar_prefetch = 0 : i64, scratch_operands = 0 : i64, tpu.core_type = #tpu.core_type<tc>, window_params = [{transform_indices = @transform_0, window_bounds = array<i64: 256, 143>}, {pipeline_mode = #tpu.pipeline_mode<synchronous>, transform_indices = @transform_1, window_bounds = array<i64: 143, 320>}, {pipeline_mode = #tpu.pipeline_mode<synchronous>, transform_indices = @transform_2, window_bounds = array<i64: 1, 320>}, {pipeline_mode = #tpu.pipeline_mode<synchronous>, transform_indices = @transform_3, window_bounds = array<i64: 1, 320>}, {transform_indices = @transform_4, window_bounds = array<i64: 1>}, {transform_indices = @transform_5, window_bounds = array<i64: 1, 256>}]} {
    %c0 = arith.constant 0 : index
    %c0_0 = arith.constant 0 : index
    %0 = vector.load %arg1[%c0, %c0_0] : memref<256x143xf32, #tpu.memory_space<vmem>>, vector<256x143xf32>
    %1 = arith.truncf %0 : vector<256x143xf32> to vector<256x143xbf16>
    %c0_1 = arith.constant 0 : index
    %c0_2 = arith.constant 0 : index
    %2 = vector.load %arg2[%c0_1, %c0_2] : memref<143x320xbf16, #tpu.memory_space<vmem>>, vector<143x320xbf16>
    %cst = arith.constant dense<0.000000e+00> : vector<256x320xf32>
    %3 = tpu.matmul %1, %2, %cst {dimension_numbers = #tpu.dot_dimension_numbers<[1], [0], [0], [1], [0, 0, 1, 1], [], []>} : vector<256x143xbf16>, vector<143x320xbf16>, vector<256x320xf32> -> vector<256x320xf32>
    %c0_3 = arith.constant 0 : index
    %c0_4 = arith.constant 0 : index
    %4 = vector.load %arg3[%c0_3, %c0_4] : memref<1x320xf32, #tpu.memory_space<vmem>>, vector<1x320xf32>
    %5 = vector.broadcast %4 : vector<1x320xf32> to vector<256x320xf32>
    %6 = arith.addf %3, %5 : vector<256x320xf32>
    %cst_5 = arith.constant 0.000000e+00 : f32
    %7 = vector.broadcast %cst_5 : f32 to vector<256x320xf32>
    %8 = arith.maximumf %6, %7 : vector<256x320xf32>
    %9 = arith.truncf %8 : vector<256x320xf32> to vector<256x320xbf16>
    %c0_6 = arith.constant 0 : index
    %c0_7 = arith.constant 0 : index
    %10 = vector.load %arg4[%c0_6, %c0_7] : memref<1x320xf32, #tpu.memory_space<vmem>>, vector<1x320xf32>
    %11 = arith.truncf %10 : vector<1x320xf32> to vector<1x320xbf16>
    %12 = vector.broadcast %11 : vector<1x320xbf16> to vector<256x320xbf16>
    %13 = arith.mulf %9, %12 : vector<256x320xbf16>
    %14 = arith.extf %13 : vector<256x320xbf16> to vector<256x320xf32>
    %cst_8 = arith.constant dense<0.000000e+00> : vector<256xf32>
    %15 = vector.multi_reduction <add>, %14, %cst_8 [1] : vector<256x320xf32> to vector<256xf32>
    %c0_9 = arith.constant 0 : index
    %16 = memref.load %arg5[%c0_9] : memref<1xf32, #tpu.memory_space<smem>>
    %17 = vector.broadcast %16 : f32 to vector<256xf32>
    %18 = arith.addf %15, %17 : vector<256xf32>
    %19 = vector.shape_cast %18 : vector<256xf32> to vector<1x256xf32>
    %c0_10 = arith.constant 0 : index
    %c0_11 = arith.constant 0 : index
    %20 = vector.load %arg6[%c0_10, %c0_11] : memref<1x256xf32, #tpu.memory_space<vmem>>, vector<1x256xf32>
    tpu.vector_store %arg6[%c0_10, %c0_11], %19 {strides = array<i32>} : memref<1x256xf32, #tpu.memory_space<vmem>>, vector<1x256xf32>,
    return
  }
  func.func @transform_0(%arg0: i32) -> (i32, i32) {
    %c0_i32 = arith.constant 0 : i32
    %c0_i32_0 = arith.constant 0 : i32
    return %arg0, %c0_i32 : i32, i32
  }
  func.func @transform_1(%arg0: i32) -> (i32, i32) {
    %c0_i32 = arith.constant 0 : i32
    %c0_i32_0 = arith.constant 0 : i32
    %c0_i32_1 = arith.constant 0 : i32
    return %c0_i32, %c0_i32_0 : i32, i32
  }
  func.func @transform_2(%arg0: i32) -> (i32, i32) {
    %c0_i32 = arith.constant 0 : i32
    %c0_i32_0 = arith.constant 0 : i32
    %c0_i32_1 = arith.constant 0 : i32
    return %c0_i32, %c0_i32_0 : i32, i32
  }
  func.func @transform_3(%arg0: i32) -> (i32, i32) {
    %c0_i32 = arith.constant 0 : i32
    %c0_i32_0 = arith.constant 0 : i32
    %c0_i32_1 = arith.constant 0 : i32
    return %c0_i32, %c0_i32_0 : i32, i32
  }
  func.func @transform_4(%arg0: i32) -> i32 {
    %c0_i32 = arith.constant 0 : i32
    %c0_i32_0 = arith.constant 0 : i32
    return %c0_i32 : i32
  }
  func.func @transform_5(%arg0: i32) -> (i32, i32) {
    %c0_i32 = arith.constant 0 : i32
    %c0_i32_0 = arith.constant 0 : i32
    return %c0_i32, %arg0 : i32, i32
  }
}

</mosaic_0001>

<llo_original>
// kernel: _net_forward_impl.1
$region0: #{_net_forward_impl.1}
  #allocation0 [shape = 'u32[]', space=smem, size = 0x4, offset = 0x4, fixed_abs, tag = 'smem constant byte address 0x4 - core index']
  #allocation1 [shape = 'u32[72,128]{1,0:T(1,128)}', space=vmem, size = 0x9000, scoped, tag = 'internal scratch']
  #allocation2 [shape = 'f32[1]{0:T(128)S(6)}', space=smem, size = 0x200, scoped, tag = 'scoped memory for _net_forward_impl.1']
  %s0 = inlined_call_operand.vmem [shape: f32[300,143], index: 0, kind: input, shape index: {}]
  %s1 = inlined_call_operand.vmem [shape: bf16[143,320], index: 1, kind: input, shape index: {}]
  %s2 = inlined_call_operand.vmem [shape: f32[1,320], index: 2, kind: input, shape index: {}]
  %s3 = inlined_call_operand.vmem [shape: f32[1,320], index: 3, kind: input, shape index: {}]
  %s4 = inlined_call_operand.<no memory space> [shape: f32[1], index: 4, kind: input, shape index: {}]
  %s5 = inlined_call_operand.hbm [shape: f32[1,300], index: 5, kind: output, shape index: {}]
  %s6 = sld [smem:[#allocation0]]
  $region53: #{_net_forward_impl.1} parent=0
    _
  %s8 = ssub.s32 1, %s6
  %s9 = scalar_select 0, %s8, %s6
  %10 = sst [smem:[#allocation2]] %s4
  $region1: #{_net_forward_impl.1} parent=0
    #allocation3 [shape = 'u8[2048]{0}', space=vmem, size = 0x800, scoped, tag = 'output window, operand 0']
    #allocation4 [shape = 's32[2]{0}', space=sflag, size = 0x8, scoped, tag = 'scoped memory for _net_forward_impl.1']
    %11 = vsyncpa [#allocation4], 0
    %s12 = scalar_lea.sflag [#allocation4], 1
    %13 = vsyncpa %s12, 0
    loop: start=0, step=1, limit=4
    $region2: #{_net_forward_impl.1} parent=1 // loop_pre_header
      _
    $region3: #{_net_forward_impl.1} parent=1 // loop_header
      %s15 = sphi 0, %s19
      %p16 = scmp.ge.s32.totalorder %s15, 4
      %s25 = sphi 0, %s27
      %s28 = sphi 0, %s25
      %s29 = sphi 0, %s28
      %s45 = sphi 0, %s29
      %s49 = sphi 0, %s49
      %s51 = sphi 0, %s49
      %s52 = sphi 0, %s51
      %s66 = sphi 0, %s52
      %s70 = sphi 0, %s70
      %s72 = sphi 0, %s70
      %s73 = sphi 0, %s72
      %s87 = sphi 0, %s73
      %s91 = sphi 0, %s91
      %s93 = sphi 0, %s91
      %s94 = sphi 0, %s93
      %s108 = sphi 0, %s94
      %s112 = sphi 0, %s112
      %s114 = sphi 0, %s112
      %s115 = sphi 0, %s114
      %s129 = sphi 0, %s115
      %s135 = sphi 0, %s137
      %s138 = sphi 0, %s135
      %s139 = sphi 0, %s138
      %s155 = sphi 0, %s139
    $region4: #{_net_forward_impl.1} parent=1 // loop_header_branch
      %18 = sbr.rel (%p16) target = $region8
    $region5: #{_net_forward_impl.1} parent=1 // loop_body
      %s20 = ssub.s32 %s15, 1
      %s21 = ssub.s32 %s15, 2
      %s22 = sadd.s32 %s15, 1
      %s23 = ssub.s32 %s15, %s22
      %p24 = scmp.eq.s32.totalorder %s23, 0
      %s26 = sadd.s32 %s25, 1
      %s27 = scalar_select %p24, %s25, %s26
      %p30 = pneg %p24
      %p31 = scmp.eq.s32.totalorder %s15, 1
      %p32 = por %p30, %p31
      %p33 = scmp.ne.s32.totalorder %s25, %s28
      %p34 = scmp.eq.s32.totalorder %s15, 0
      %p35 = por %p33, %p34
      %p36 = scmp.ne.s32.totalorder %s25, %s28
      %p37 = scmp.eq.s32.totalorder %s20, 1
      %p38 = por %p36, %p37
      %p39 = scmp.ne.s32.totalorder %s28, %s29
      %p40 = scmp.eq.s32.totalorder %s20, 0
      %p41 = por %p39, %p40
      %p42 = scmp.ne.s32.totalorder %s28, %s29
      %p43 = scmp.eq.s32.totalorder %s21, 1
      %p44 = por %p42, %p43
      %p46 = scmp.ne.s32.totalorder %s29, %s45
      %p47 = scmp.eq.s32.totalorder %s21, 0
      %p48 = por %p46, %p47
      %s50 = sadd.s32 %s49, 1
      %p53 = scmp.eq.s32.totalorder %s15, 1
      %p54 = scmp.ne.s32.totalorder %s49, %s51
      %p55 = scmp.eq.s32.totalorder %s15, 0
      %p56 = por %p54, %p55
      %p57 = scmp.ne.s32.totalorder %s49, %s51
      %p58 = scmp.eq.s32.totalorder %s20, 1
      %p59 = por %p57, %p58
      %p60 = scmp.ne.s32.totalorder %s51, %s52
      %p61 = scmp.eq.s32.totalorder %s20, 0
      %p62 = por %p60, %p61
      %p63 = scmp.ne.s32.totalorder %s51, %s52
      %p64 = scmp.eq.s32.totalorder %s21, 1
      %p65 = por %p63, %p64
      %p67 = scmp.ne.s32.totalorder %s52, %s66
      %p68 = scmp.eq.s32.totalorder %s21, 0
      %p69 = por %p67, %p68
      %s71 = sadd.s32 %s70, 1
      %p74 = scmp.eq.s32.totalorder %s15, 1
      %p75 = scmp.ne.s32.totalorder %s70, %s72
      %p76 = scmp.eq.s32.totalorder %s15, 0
      %p77 = por %p75, %p76
      %p78 = scmp.ne.s32.totalorder %s70, %s72
      %p79 = scmp.eq.s32.totalorder %s20, 1
      %p80 = por %p78, %p79
      %p81 = scmp.ne.s32.totalorder %s72, %s73
      %p82 = scmp.eq.s32.totalorder %s20, 0
      %p83 = por %p81, %p82
      %p84 = scmp.ne.s32.totalorder %s72, %s73
      %p85 = scmp.eq.s32.totalorder %s21, 1
      %p86 = por %p84, %p85
      %p88 = scmp.ne.s32.totalorder %s73, %s87
      %p89 = scmp.eq.s32.totalorder %s21, 0
      %p90 = por %p88, %p89
      %s92 = sadd.s32 %s91, 1
      %p95 = scmp.eq.s32.totalorder %s15, 1
      %p96 = scmp.ne.s32.totalorder %s91, %s93
      %p97 = scmp.eq.s32.totalorder %s15, 0
      %p98 = por %p96, %p97
      %p99 = scmp.ne.s32.totalorder %s91, %s93
      %p100 = scmp.eq.s32.totalorder %s20, 1
      %p101 = por %p99, %p100
      %p102 = scmp.ne.s32.totalorder %s93, %s94
      %p103 = scmp.eq.s32.totalorder %s20, 0
      %p104 = por %p102, %p103
      %p105 = scmp.ne.s32.totalorder %s93, %s94
      %p106 = scmp.eq.s32.totalorder %s21, 1
      %p107 = por %p105, %p106
      %p109 = scmp.ne.s32.totalorder %s94, %s108
      %p110 = scmp.eq.s32.totalorder %s21, 0
      %p111 = por %p109, %p110
      %s113 = sadd.s32 %s112, 1
      %p116 = scmp.eq.s32.totalorder %s15, 1
      %p117 = scmp.ne.s32.totalorder %s112, %s114
      %p118 = scmp.eq.s32.totalorder %s15, 0
      %p119 = por %p117, %p118
      %p120 = scmp.ne.s32.totalorder %s112, %s114
      %p121 = scmp.eq.s32.totalorder %s20, 1
      %p122 = por %p120, %p121
      %p123 = scmp.ne.s32.totalorder %s114, %s115
      %p124 = scmp.eq.s32.totalorder %s20, 0
      %p125 = por %p123, %p124
      %p126 = scmp.ne.s32.totalorder %s114, %s115
      %p127 = scmp.eq.s32.totalorder %s21, 1
      %p128 = por %p126, %p127
      %p130 = scmp.ne.s32.totalorder %s115, %s129
      %p131 = scmp.eq.s32.totalorder %s21, 0
      %p132 = por %p130, %p131
      %s133 = ssub.s32 %s15, %s22
      %p134 = scmp.eq.s32.totalorder %s133, 0
      %s136 = sadd.s32 %s135, 1
      %s137 = scalar_select %p134, %s135, %s136
      %p140 = pneg %p134
      %p141 = scmp.eq.s32.totalorder %s15, 1
      %p142 = por %p140, %p141
      %p143 = scmp.ne.s32.totalorder %s135, %s138
      %p144 = scmp.eq.s32.totalorder %s15, 0
      %p145 = por %p143, %p144
      %p146 = scmp.ne.s32.totalorder %s135, %s138
      %p147 = scmp.eq.s32.totalorder %s20, 1
      %p148 = por %p146, %p147
      %p149 = scmp.ne.s32.totalorder %s138, %s139
      %p150 = scmp.eq.s32.totalorder %s20, 0
      %p151 = por %p149, %p150
      %p152 = scmp.ne.s32.totalorder %s138, %s139
      %p153 = scmp.eq.s32.totalorder %s21, 1
      %p154 = por %p152, %p153
      %p156 = scmp.ne.s32.totalorder %s139, %s155
      %p157 = scmp.eq.s32.totalorder %s21, 0
      %p158 = por %p156, %p157
      %p159 = scmp.le.s32.totalorder 1, %s15
      %p160 = scmp.lt.s32.totalorder %s15, 3
      %p161 = pnand %p159, %p160
      %p162 = pneg %p161
      // Predicated region
      $region9: #{_net_forward_impl.1} parent=5 // pred_check
        _
      $region10: #{_net_forward_impl.1} parent=5 // pred_check_branch
        %164 = sbr.rel (%p161) target = $region12
      $region11: #{_net_forward_impl.1} parent=5 // pred_region
        %s165 = ssub.s32 %s15, 1
        // Predicated region
        $region13: #{_net_forward_impl.1} parent=11 // pred_check
          %p166 = pneg %p62
        $region14: #{_net_forward_impl.1} parent=11 // pred_check_branch
          %168 = sbr.rel (%p166) target = $region16
        $region15: #{_net_forward_impl.1} parent=11 // pred_region
          _
        $region16: #{_net_forward_impl.1} parent=11 // pred_fallthru
          _
        // Predicated region
        $region17: #{_net_forward_impl.1} parent=11 // pred_check
          %p169 = pneg %p83
        $region18: #{_net_forward_impl.1} parent=11 // pred_check_branch
          %171 = sbr.rel (%p169) target = $region20
        $region19: #{_net_forward_impl.1} parent=11 // pred_region
          _
        $region20: #{_net_forward_impl.1} parent=11 // pred_fallthru
          _
        // Predicated region
        $region21: #{_net_forward_impl.1} parent=11 // pred_check
          %p172 = pneg %p104
        $region22: #{_net_forward_impl.1} parent=11 // pred_check_branch
          %174 = sbr.rel (%p172) target = $region24
        $region23: #{_net_forward_impl.1} parent=11 // pred_region
          _
        $region24: #{_net_forward_impl.1} parent=11 // pred_fallthru
          _
        // Predicated region
        $region25: #{_net_forward_impl.1} parent=11 // pred_check
          %p175 = pneg %p125
        $region26: #{_net_forward_impl.1} parent=11 // pred_check_branch
          %177 = sbr.rel (%p175) target = $region28
        $region27: #{_net_forward_impl.1} parent=11 // pred_region
          _
        $region28: #{_net_forward_impl.1} parent=11 // pred_fallthru
          _
      $region12: #{_net_forward_impl.1} parent=5 // pred_fallthru
        _
      %p178 = scmp.lt.s32.totalorder %s15, 2
      // Predicated region
      $region29: #{_net_forward_impl.1} parent=5 // pred_check
        %p179 = pneg %p178
      $region30: #{_net_forward_impl.1} parent=5 // pred_check_branch
        %181 = sbr.rel (%p179) target = $region32
      $region31: #{_net_forward_impl.1} parent=5 // pred_region
        // Predicated region
        $region33: #{_net_forward_impl.1} parent=31 // pred_check
          %p182 = pneg %p35
        $region34: #{_net_forward_impl.1} parent=31 // pred_check_branch
          %184 = sbr.rel (%p182) target = $region36
        $region35: #{_net_forward_impl.1} parent=31 // pred_region
          %s185 = smul.u32 32, %s15
          %s186 = ssub.s32 38, %s185
          %p187 = scmp.lt.s32.totalorder %s186, 32
          %s188 = scalar_select %p187, %s186, 32
          %s189 = smul.u32 8, %s188
          %s190 = smul.u32 %s189, 2
          %p191 = scmp.lt.s32.totalorder %s185, 37
          %s192 = scalar_select %p191, %s185, 37
          %s193 = smul.addr %s192, 2
          %s194 = smul.addr %s193, 8
          %s195 = scalar_lea.vmem %s0, %s194
          %s196 = smul.u32 32, %s15
          %s197 = ssub.s32 38, %s196
          %p198 = scmp.lt.s32.totalorder %s197, 32
          %s199 = scalar_select %p198, %s197, 32
          %s200 = smul.u32 8, %s199
          %s201 = smul.u32 %s200, 2
        $region36: #{_net_forward_impl.1} parent=31 // pred_fallthru
          _
      $region32: #{_net_forward_impl.1} parent=5 // pred_fallthru
        _
      %p202 = scmp.le.s32.totalorder 1, %s15
      %p203 = scmp.lt.s32.totalorder %s15, 3
      %p204 = pnand %p202, %p203
      %p205 = pneg %p204
      // Predicated region
      $region37: #{_net_forward_impl.1} parent=5 // pred_check
        _
      $region38: #{_net_forward_impl.1} parent=5 // pred_check_branch
        %207 = sbr.rel (%p204) target = $region40
      $region39: #{_net_forward_impl.1} parent=5 // pred_region
        %s208 = ssub.s32 %s15, 1
        %s209 = smul.u32 32, %s20
        %s210 = ssub.s32 38, %s209
        %p211 = scmp.lt.s32.totalorder %s210, 32
        %s212 = scalar_select %p211, %s210, 32
        %s213 = smul.u32 8, %s212
        %s214 = smul.u32 %s213, 2
        %p215 = scmp.lt.s32.totalorder %s209, 37
        %s216 = scalar_select %p215, %s209, 37
        %s217 = smul.addr %s216, 2
        %s218 = smul.addr %s217, 8
        %s219 = scalar_lea.vmem %s0, %s218
        %p220 = pneg %p41
        %p221 = pneg %p38
        %p222 = pneg %p62
        %p223 = pneg %p59
        %p224 = pneg %p83
        %p225 = pneg %p80
        %p226 = pneg %p104
        %p227 = pneg %p101
        %p228 = pneg %p125
        %p229 = pneg %p122
        %p230 = pneg %p151
        %p231 = pneg %p148
        %s232 = sand.u32 %s138, 1
        %s233 = scalar_lea.sflag [#allocation4], %s232
        %s234 = sand.u32 %s138, 1
        %s235 = smul.addr %s234, 2
        %s236 = scalar_lea.vmem [#allocation3], %s235
        %s237 = smul.u32 32, %s20
        %s238 = ssub.s32 38, %s237
        %p239 = scmp.lt.s32.totalorder %s238, 32
        %s240 = scalar_select %p239, %s238, 32
        %s241 = smul.u32 8, %s240
        %s242 = smul.u32 %s241, 2
        %p243 = scmp.lt.s32.totalorder %s237, 37
        %s244 = scalar_select %p243, %s237, 37
        %s245 = smul.addr %s244, 2
        %s246 = smul.addr %s245, 8
        %s247 = scalar_lea.vmem %s0, %s246
        %s248 = smul.u32 32, %s20
        %s249 = ssub.s32 38, %s248
        %p250 = scmp.lt.s32.totalorder %s249, 32
        %s251 = scalar_select %p250, %s249, 32
        %s252 = smul.u32 8, %s251
        %s253 = smul.u32 %s252, 2
        %s254 = smul.u32 2, %s20
        %s255 = ssub.s32 3, %s254
        %p256 = scmp.lt.s32.totalorder %s255, 2
        %s257 = scalar_select %p256, %s255, 2
        %v259 = vld [vmem:[%s247] sm:$0xff]
        %v260 = vld [vmem:[%s247 + $0x8] sm:$0xff]
        %v261 = vld [vmem:[%s247 + $0x10] sm:$0xff]
        %v262 = vld [vmem:[%s247 + $0x18] sm:$0xff]
        %v263 = vld [vmem:[%s247 + $0x20] sm:$0xff]
        %v264 = vld [vmem:[%s247 + $0x28] sm:$0xff]
        %v265 = vld [vmem:[%s247 + $0x30] sm:$0xff]
        %v266 = vld [vmem:[%s247 + $0x38] sm:$0xff]
        %v267 = vld [vmem:[%s247 + $0x40] sm:$0xff]
        %v268 = vld [vmem:[%s247 + $0x48] sm:$0xff]
        %v269 = vld [vmem:[%s247 + $0x50] sm:$0xff]
        %v270 = vld [vmem:[%s247 + $0x58] sm:$0xff]
        %v271 = vld [vmem:[%s247 + $0x60] sm:$0xff]
        %v272 = vld [vmem:[%s247 + $0x68] sm:$0xff]
        %v273 = vld [vmem:[%s247 + $0x70] sm:$0xff]
        %v274 = vld [vmem:[%s247 + $0x78] sm:$0xff]
        %v275 = vld [vmem:[%s247 + $0x80] sm:$0xff]
        %v276 = vld [vmem:[%s247 + $0x88] sm:$0xff]
        %v277 = vld [vmem:[%s247 + $0x90] sm:$0xff]
        %v278 = vld [vmem:[%s247 + $0x98] sm:$0xff]
        %v279 = vld [vmem:[%s247 + $0xa0] sm:$0xff]
        %v280 = vld [vmem:[%s247 + $0xa8] sm:$0xff]
        %v281 = vld [vmem:[%s247 + $0xb0] sm:$0xff]
        %v282 = vld [vmem:[%s247 + $0xb8] sm:$0xff]
        %v283 = vld [vmem:[%s247 + $0xc0] sm:$0xff]
        %v284 = vld [vmem:[%s247 + $0xc8] sm:$0xff]
        %v285 = vld [vmem:[%s247 + $0xd0] sm:$0xff]
        %v286 = vld [vmem:[%s247 + $0xd8] sm:$0xff]
        %v287 = vld [vmem:[%s247 + $0xe0] sm:$0xff]
        %v288 = vld [vmem:[%s247 + $0xe8] sm:$0xff]
        %v289 = vld [vmem:[%s247 + $0xf0] sm:$0xff]
        %v290 = vld [vmem:[%s247 + $0xf8] sm:$0xff]
        %v291 = vld [vmem:[%s247 + $0x100] sm:$0xff]
        %v292 = vld [vmem:[%s247 + $0x108] sm:$0xff]
        %v293 = vld [vmem:[%s247 + $0x110] sm:$0xff]
        %v294 = vld [vmem:[%s247 + $0x118] sm:$0xff]
        %v295 = vld [vmem:[%s247 + $0x120] sm:$0xff]
        %v296 = vld [vmem:[%s247 + $0x128] sm:$0xff]
        %v297 = vld [vmem:[%s247 + $0x130] sm:$0xff]
        %v298 = vld [vmem:[%s247 + $0x138] sm:$0xff]
        %v299 = vld [vmem:[%s247 + $0x140] sm:$0xff]
        %v300 = vld [vmem:[%s247 + $0x148] sm:$0xff]
        %v301 = vld [vmem:[%s247 + $0x150] sm:$0xff]
        %v302 = vld [vmem:[%s247 + $0x158] sm:$0xff]
        %v303 = vld [vmem:[%s247 + $0x160] sm:$0xff]
        %v304 = vld [vmem:[%s247 + $0x168] sm:$0xff]
        %v305 = vld [vmem:[%s247 + $0x170] sm:$0xff]
        %v306 = vld [vmem:[%s247 + $0x178] sm:$0xff]
        %v307 = vld [vmem:[%s247 + $0x180] sm:$0xff]
        %v308 = vld [vmem:[%s247 + $0x188] sm:$0xff]
        %v309 = vld [vmem:[%s247 + $0x190] sm:$0xff]
        %v310 = vld [vmem:[%s247 + $0x198] sm:$0xff]
        %v311 = vld [vmem:[%s247 + $0x1a0] sm:$0xff]
        %v312 = vld [vmem:[%s247 + $0x1a8] sm:$0xff]
        %v313 = vld [vmem:[%s247 + $0x1b0] sm:$0xff]
        %v314 = vld [vmem:[%s247 + $0x1b8] sm:$0xff]
        %v315 = vld [vmem:[%s247 + $0x1c0] sm:$0xff]
        %v316 = vld [vmem:[%s247 + $0x1c8] sm:$0xff]
        %v317 = vld [vmem:[%s247 + $0x1d0] sm:$0xff]
        %v318 = vld [vmem:[%s247 + $0x1d8] sm:$0xff]
        %v319 = vld [vmem:[%s247 + $0x1e0] sm:$0xff]
        %v320 = vld [vmem:[%s247 + $0x1e8] sm:$0xff]
        %v321 = vld [vmem:[%s247 + $0x1f0] sm:$0xff]
        %v322 = vld [vmem:[%s247 + $0x1f8] sm:$0xff]
        %v323 = vpack.c.bf16 %v261, %v259
        %v324 = vpack.c.bf16 %v262, %v260
        %v325 = vpack.c.bf16 %v265, %v263
        %v326 = vpack.c.bf16 %v266, %v264
        %v327 = vpack.c.bf16 %v269, %v267
        %v328 = vpack.c.bf16 %v270, %v268
        %v329 = vpack.c.bf16 %v273, %v271
        %v330 = vpack.c.bf16 %v274, %v272
        %v331 = vpack.c.bf16 %v277, %v275
        %v332 = vpack.c.bf16 %v278, %v276
        %v333 = vpack.c.bf16 %v281, %v279
        %v334 = vpack.c.bf16 %v282, %v280
        %v335 = vpack.c.bf16 %v285, %v283
        %v336 = vpack.c.bf16 %v286, %v284
        %v337 = vpack.c.bf16 %v289, %v287
        %v338 = vpack.c.bf16 %v290, %v288
        %v339 = vpack.c.bf16 %v293, %v291
        %v340 = vpack.c.bf16 %v294, %v292
        %v341 = vpack.c.bf16 %v297, %v295
        %v342 = vpack.c.bf16 %v298, %v296
        %v343 = vpack.c.bf16 %v301, %v299
        %v344 = vpack.c.bf16 %v302, %v300
        %v345 = vpack.c.bf16 %v305, %v303
        %v346 = vpack.c.bf16 %v306, %v304
        %v347 = vpack.c.bf16 %v309, %v307
        %v348 = vpack.c.bf16 %v310, %v308
        %v349 = vpack.c.bf16 %v313, %v311
        %v350 = vpack.c.bf16 %v314, %v312
        %v351 = vpack.c.bf16 %v317, %v315
        %v352 = vpack.c.bf16 %v318, %v316
        %v353 = vpack.c.bf16 %v321, %v319
        %v354 = vpack.c.bf16 %v322, %v320
        %v355 = vld [vmem:[%s1] sm:$0xff]
        %v356 = vld [vmem:[%s1 + $0x8] sm:$0xf]
        %v357 = vld [vmem:[%s1 + $0xc] sm:$0xff]
        %v358 = vld [vmem:[%s1 + $0x14] sm:$0xf]
        %v359 = vld [vmem:[%s1 + $0x18] sm:$0xff]
        %v360 = vld [vmem:[%s1 + $0x20] sm:$0xf]
        %v361 = vld [vmem:[%s1 + $0x24] sm:$0xff]
        %v362 = vld [vmem:[%s1 + $0x2c] sm:$0xf]
        %v363 = vld [vmem:[%s1 + $0x30] sm:$0xff]
        %v364 = vld [vmem:[%s1 + $0x38] sm:$0xf]
        %v365 = vld [vmem:[%s1 + $0x3c] sm:$0xff]
        %v366 = vld [vmem:[%s1 + $0x44] sm:$0xf]
        %v367 = vld [vmem:[%s1 + $0x48] sm:$0xff]
        %v368 = vld [vmem:[%s1 + $0x50] sm:$0xf]
        %v369 = vld [vmem:[%s1 + $0x54] sm:$0xff]
        %v370 = vld [vmem:[%s1 + $0x5c] sm:$0xf]
        %v371 = vld [vmem:[%s1 + $0x60] sm:$0xff]
        %v372 = vld [vmem:[%s1 + $0x68] sm:$0xf]
        %v373 = vld [vmem:[%s1 + $0x6c] sm:$0xff]
        %v374 = vld [vmem:[%s1 + $0x74] sm:$0xf]
        %v375 = vld [vmem:[%s1 + $0x78] sm:$0xff]
        %v376 = vld [vmem:[%s1 + $0x80] sm:$0xf]
        %v377 = vld [vmem:[%s1 + $0x84] sm:$0xff]
        %v378 = vld [vmem:[%s1 + $0x8c] sm:$0xf]
        %v379 = vld [vmem:[%s1 + $0x90] sm:$0xff]
        %v380 = vld [vmem:[%s1 + $0x98] sm:$0xf]
        %v381 = vld [vmem:[%s1 + $0x9c] sm:$0xff]
        %v382 = vld [vmem:[%s1 + $0xa4] sm:$0xf]
        %v383 = vld [vmem:[%s1 + $0xa8] sm:$0xff]
        %v384 = vld [vmem:[%s1 + $0xb0] sm:$0xf]
        %v385 = vld [vmem:[%s1 + $0xb4] sm:$0xff]
        %v386 = vld [vmem:[%s1 + $0xbc] sm:$0xf]
        %v387 = vld [vmem:[%s1 + $0xc0] sm:$0xff]
        %v388 = vld [vmem:[%s1 + $0xc8] sm:$0xf]
        %v389 = vld [vmem:[%s1 + $0xcc] sm:$0xff]
        %v390 = vld [vmem:[%s1 + $0xd4] sm:$0xf]
        %v391 = vld [vmem:[%s2] sm:$0x7]
        %v393 = vperm.slane %v391, 0
        %v394 = vperm.slane %v391, 1
        %v395 = vperm.slane %v391, 2
        %v435 = vunpack.c.l.b16 %v355
        %v436 = vunpack.c.h.b16 %v355
        %v437 = vunpack.c.l.b16 %v356
        %v438 = vunpack.c.l.b16 %v357
        %v439 = vunpack.c.h.b16 %v357
        %v440 = vunpack.c.l.b16 %v358
        %v441 = vunpack.c.l.b16 %v359
        %v442 = vunpack.c.h.b16 %v359
        %v443 = vunpack.c.l.b16 %v360
        %v444 = vunpack.c.l.b16 %v361
        %v445 = vunpack.c.h.b16 %v361
        %v446 = vunpack.c.l.b16 %v362
        %v447 = vunpack.c.l.b16 %v363
        %v448 = vunpack.c.h.b16 %v363
        %v449 = vunpack.c.l.b16 %v364
        %v450 = vunpack.c.l.b16 %v365
        %v451 = vunpack.c.h.b16 %v365
        %v452 = vunpack.c.l.b16 %v366
        %v453 = vunpack.c.l.b16 %v367
        %v454 = vunpack.c.h.b16 %v367
        %v455 = vunpack.c.l.b16 %v368
        %v456 = vunpack.c.l.b16 %v369
        %v457 = vunpack.c.h.b16 %v369
        %v458 = vunpack.c.l.b16 %v370
        %v459 = vunpack.c.l.b16 %v371
        %v460 = vunpack.c.h.b16 %v371
        %v461 = vunpack.c.l.b16 %v372
        %v462 = vunpack.c.l.b16 %v373
        %v463 = vunpack.c.h.b16 %v373
        %v464 = vunpack.c.l.b16 %v374
        %v465 = vunpack.c.l.b16 %v375
        %v466 = vunpack.c.h.b16 %v375
        %v467 = vunpack.c.l.b16 %v376
        %v468 = vunpack.c.l.b16 %v377
        %v469 = vunpack.c.h.b16 %v377
        %v470 = vunpack.c.l.b16 %v378
        %v471 = vunpack.c.l.b16 %v379
        %v472 = vunpack.c.h.b16 %v379
        %v473 = vunpack.c.l.b16 %v380
        %v474 = vunpack.c.l.b16 %v381
        %v475 = vunpack.c.h.b16 %v381
        %v476 = vunpack.c.l.b16 %v382
        %v477 = vunpack.c.l.b16 %v383
        %v478 = vunpack.c.h.b16 %v383
        %v479 = vunpack.c.l.b16 %v384
        %v480 = vunpack.c.l.b16 %v385
        %v481 = vunpack.c.h.b16 %v385
        %v482 = vunpack.c.l.b16 %v386
        %v483 = vunpack.c.l.b16 %v387
        %v484 = vunpack.c.h.b16 %v387
        %v485 = vunpack.c.l.b16 %v388
        %v486 = vunpack.c.l.b16 %v389
        %v487 = vunpack.c.h.b16 %v389
        %v488 = vunpack.c.l.b16 %v390
        %v489 = vpack.c.b16 %v438, %v435
        %v490 = vpack.c.b16 %v439, %v436
        %v491 = vpack.c.b16 %v440, %v437
        %v492 = vpack.c.b16 %v444, %v441
        %v493 = vpack.c.b16 %v445, %v442
        %v494 = vpack.c.b16 %v446, %v443
        %v495 = vpack.c.b16 %v450, %v447
        %v496 = vpack.c.b16 %v451, %v448
        %v497 = vpack.c.b16 %v452, %v449
        %v498 = vpack.c.b16 %v456, %v453
        %v499 = vpack.c.b16 %v457, %v454
        %v500 = vpack.c.b16 %v458, %v455
        %v501 = vpack.c.b16 %v462, %v459
        %v502 = vpack.c.b16 %v463, %v460
        %v503 = vpack.c.b16 %v464, %v461
        %v504 = vpack.c.b16 %v468, %v465
        %v505 = vpack.c.b16 %v469, %v466
        %v506 = vpack.c.b16 %v470, %v467
        %v507 = vpack.c.b16 %v474, %v471
        %v508 = vpack.c.b16 %v475, %v472
        %v509 = vpack.c.b16 %v476, %v473
        %v510 = vpack.c.b16 %v480, %v477
        %v511 = vpack.c.b16 %v481, %v478
        %v512 = vpack.c.b16 %v482, %v479
        %v513 = vpack.c.b16 %v486, %v483
        %v514 = vpack.c.b16 %v487, %v484
        %v515 = vpack.c.b16 %v488, %v485
        %vm540 = vcmask 121856
        %v542 = vsel %vm540, %v324, 0
        %v545 = vsel %vm540, %v326, 0
        %v548 = vsel %vm540, %v328, 0
        %v551 = vsel %vm540, %v330, 0
        %v554 = vsel %vm540, %v332, 0
        %v557 = vsel %vm540, %v334, 0
        %v560 = vsel %vm540, %v336, 0
        %v563 = vsel %vm540, %v338, 0
        %v566 = vsel %vm540, %v340, 0
        %v569 = vsel %vm540, %v342, 0
        %v572 = vsel %vm540, %v344, 0
        %v575 = vsel %vm540, %v346, 0
        %v578 = vsel %vm540, %v348, 0
        %v581 = vsel %vm540, %v350, 0
        %v584 = vsel %vm540, %v352, 0
        %v587 = vsel %vm540, %v354, 0
        %vm589 = vcmask 1046528
        %vm590 = vcmask 1047552
        %v591 = vsel %vm589, 4294967295, 65535
        %v592 = vsel %vm590, %v591, 0
        %v594 = vand.u32 %v513, %v592
        %v597 = vand.u32 %v514, %v592
        %v600 = vand.u32 %v515, %v592
        %602 = vmatpush.bf16.msra.mxu0 %v510
        %603 = vmatpush.bf16.msra.mxu0 %v507
        %604 = vmatpush.bf16.msra.mxu0 %v504
        %605 = vmatpush.bf16.msra.mxu0 %v501
        %606 = vmatpush.bf16.msra.mxu0 %v498
        %607 = vmatpush.bf16.msra.mxu0 %v495
        %608 = vmatpush.bf16.msra.mxu0 %v492
        %609 = vmatpush.bf16.msra.mxu0 %v489
        %610 = vmatmul.bf16.gmra.mxu0 %v323
        %v611 = vpop.f32.mrf.mxu0
        %v612 = vadd.f32 %v393, %v611
        %v613 = vpop.f32.mrf.mxu0
        %v614 = vadd.f32 %v393, %v613
        %615 = vmatmul.bf16.gmra.mxu0 %v325
        %v616 = vpop.f32.mrf.mxu0
        %v617 = vadd.f32 %v393, %v616
        %v618 = vpop.f32.mrf.mxu0
        %v619 = vadd.f32 %v393, %v618
        %620 = vmatmul.bf16.gmra.mxu0 %v327
        %v621 = vpop.f32.mrf.mxu0
        %v622 = vadd.f32 %v393, %v621
        %v623 = vpop.f32.mrf.mxu0
        %v624 = vadd.f32 %v393, %v623
        %625 = vmatmul.bf16.gmra.mxu0 %v329
        %v626 = vpop.f32.mrf.mxu0
        %v627 = vadd.f32 %v393, %v626
        %v628 = vpop.f32.mrf.mxu0
        %v629 = vadd.f32 %v393, %v628
        %630 = vmatmul.bf16.gmra.mxu0 %v331
        %v631 = vpop.f32.mrf.mxu0
        %v632 = vadd.f32 %v393, %v631
        %v633 = vpop.f32.mrf.mxu0
        %v634 = vadd.f32 %v393, %v633
        %635 = vmatmul.bf16.gmra.mxu0 %v333
        %v636 = vpop.f32.mrf.mxu0
        %v637 = vadd.f32 %v393, %v636
        %v638 = vpop.f32.mrf.mxu0
        %v639 = vadd.f32 %v393, %v638
        %640 = vmatmul.bf16.gmra.mxu0 %v335
        %v641 = vpop.f32.mrf.mxu0
        %v642 = vadd.f32 %v393, %v641
        %v643 = vpop.f32.mrf.mxu0
        %v644 = vadd.f32 %v393, %v643
        %645 = vmatmul.bf16.gmra.mxu0 %v337
        %v646 = vpop.f32.mrf.mxu0
        %v647 = vadd.f32 %v393, %v646
        %v648 = vpop.f32.mrf.mxu0
        %v649 = vadd.f32 %v393, %v648
        %650 = vmatmul.bf16.gmra.mxu0 %v339
        %v651 = vpop.f32.mrf.mxu0
        %v652 = vadd.f32 %v393, %v651
        %v653 = vpop.f32.mrf.mxu0
        %v654 = vadd.f32 %v393, %v653
        %655 = vmatmul.bf16.gmra.mxu0 %v341
        %v656 = vpop.f32.mrf.mxu0
        %v657 = vadd.f32 %v393, %v656
        %v658 = vpop.f32.mrf.mxu0
        %v659 = vadd.f32 %v393, %v658
        %660 = vmatmul.bf16.gmra.mxu0 %v343
        %v661 = vpop.f32.mrf.mxu0
        %v662 = vadd.f32 %v393, %v661
        %v663 = vpop.f32.mrf.mxu0
        %v664 = vadd.f32 %v393, %v663
        %665 = vmatmul.bf16.gmra.mxu0 %v345
        %v666 = vpop.f32.mrf.mxu0
        %v667 = vadd.f32 %v393, %v666
        %v668 = vpop.f32.mrf.mxu0
        %v669 = vadd.f32 %v393, %v668
        %670 = vmatmul.bf16.gmra.mxu0 %v347
        %v671 = vpop.f32.mrf.mxu0
        %v672 = vadd.f32 %v393, %v671
        %v673 = vpop.f32.mrf.mxu0
        %v674 = vadd.f32 %v393, %v673
        %675 = vmatmul.bf16.gmra.mxu0 %v349
        %v676 = vpop.f32.mrf.mxu0
        %v677 = vadd.f32 %v393, %v676
        %v678 = vpop.f32.mrf.mxu0
        %v679 = vadd.f32 %v393, %v678
        %680 = vmatmul.bf16.gmra.mxu0 %v351
        %v681 = vpop.f32.mrf.mxu0
        %v682 = vadd.f32 %v393, %v681
        %v683 = vpop.f32.mrf.mxu0
        %v684 = vadd.f32 %v393, %v683
        %685 = vmatmul.bf16.gmra.mxu0 %v353
        %v686 = vpop.f32.mrf.mxu0
        %v687 = vadd.f32 %v393, %v686
        %v688 = vpop.f32.mrf.mxu0
        %v689 = vadd.f32 %v393, %v688
        %690 = vdwg.mxu0
        %691 = vmatpush.bf16.msra.mxu0 0
        %692 = vmatpush.bf16.msra.mxu0 0
        %693 = vmatpush.bf16.msra.mxu0 0
        %694 = vmatpush.bf16.msra.mxu0 0
        %695 = vmatpush.bf16.msra.mxu0 0
        %696 = vmatpush.bf16.msra.mxu0 0
        %697 = vmatpush.bf16.msra.mxu0 0
        %698 = vmatpush.bf16.msra.mxu0 %v594
        %699 = vmatmul.bf16.gmra.mxu0 %v542
        %v700 = vpop.f32.mrf.mxu0
        %v701 = vadd.f32 %v612, %v700
        %v702 = vpop.f32.mrf.mxu0
        %v703 = vadd.f32 %v614, %v702
        %704 = vmatmul.bf16.gmra.mxu0 %v545
        %v705 = vpop.f32.mrf.mxu0
        %v706 = vadd.f32 %v617, %v705
        %v707 = vpop.f32.mrf.mxu0
        %v708 = vadd.f32 %v619, %v707
        %709 = vmatmul.bf16.gmra.mxu0 %v548
        %v710 = vpop.f32.mrf.mxu0
        %v711 = vadd.f32 %v622, %v710
        %v712 = vpop.f32.mrf.mxu0
        %v713 = vadd.f32 %v624, %v712
        %714 = vmatmul.bf16.gmra.mxu0 %v551
        %v715 = vpop.f32.mrf.mxu0
        %v716 = vadd.f32 %v627, %v715
        %v717 = vpop.f32.mrf.mxu0
        %v718 = vadd.f32 %v629, %v717
        %719 = vmatmul.bf16.gmra.mxu0 %v554
        %v720 = vpop.f32.mrf.mxu0
        %v721 = vadd.f32 %v632, %v720
        %v722 = vpop.f32.mrf.mxu0
        %v723 = vadd.f32 %v634, %v722
        %724 = vmatmul.bf16.gmra.mxu0 %v557
        %v725 = vpop.f32.mrf.mxu0
        %v726 = vadd.f32 %v637, %v725
        %v727 = vpop.f32.mrf.mxu0
        %v728 = vadd.f32 %v639, %v727
        %729 = vmatmul.bf16.gmra.mxu0 %v560
        %v730 = vpop.f32.mrf.mxu0
        %v731 = vadd.f32 %v642, %v730
        %v732 = vpop.f32.mrf.mxu0
        %v733 = vadd.f32 %v644, %v732
        %734 = vmatmul.bf16.gmra.mxu0 %v563
        %v735 = vpop.f32.mrf.mxu0
        %v736 = vadd.f32 %v647, %v735
        %v737 = vpop.f32.mrf.mxu0
        %v738 = vadd.f32 %v649, %v737
        %739 = vmatmul.bf16.gmra.mxu0 %v566
        %v740 = vpop.f32.mrf.mxu0
        %v741 = vadd.f32 %v652, %v740
        %v742 = vpop.f32.mrf.mxu0
        %v743 = vadd.f32 %v654, %v742
        %744 = vmatmul.bf16.gmra.mxu0 %v569
        %v745 = vpop.f32.mrf.mxu0
        %v746 = vadd.f32 %v657, %v745
        %v747 = vpop.f32.mrf.mxu0
        %v748 = vadd.f32 %v659, %v747
        %749 = vmatmul.bf16.gmra.mxu0 %v572
        %v750 = vpop.f32.mrf.mxu0
        %v751 = vadd.f32 %v662, %v750
        %v752 = vpop.f32.mrf.mxu0
        %v753 = vadd.f32 %v664, %v752
        %754 = vmatmul.bf16.gmra.mxu0 %v575
        %v755 = vpop.f32.mrf.mxu0
        %v756 = vadd.f32 %v667, %v755
        %v757 = vpop.f32.mrf.mxu0
        %v758 = vadd.f32 %v669, %v757
        %759 = vmatmul.bf16.gmra.mxu0 %v578
        %v760 = vpop.f32.mrf.mxu0
        %v761 = vadd.f32 %v672, %v760
        %v762 = vpop.f32.mrf.mxu0
        %v763 = vadd.f32 %v674, %v762
        %764 = vmatmul.bf16.gmra.mxu0 %v581
        %v765 = vpop.f32.mrf.mxu0
        %v766 = vadd.f32 %v677, %v765
        %v767 = vpop.f32.mrf.mxu0
        %v768 = vadd.f32 %v679, %v767
        %769 = vmatmul.bf16.gmra.mxu0 %v584
        %v770 = vpop.f32.mrf.mxu0
        %v771 = vadd.f32 %v682, %v770
        %v772 = vpop.f32.mrf.mxu0
        %v773 = vadd.f32 %v684, %v772
        %774 = vmatmul.bf16.gmra.mxu0 %v587
        %v775 = vpop.f32.mrf.mxu0
        %v776 = vadd.f32 %v687, %v775
        %v777 = vpop.f32.mrf.mxu0
        %v778 = vadd.f32 %v689, %v777
        %779 = vdwg.mxu0
        %780 = vmatpush.bf16.msra.mxu0 %v511
        %781 = vmatpush.bf16.msra.mxu0 %v508
        %782 = vmatpush.bf16.msra.mxu0 %v505
        %783 = vmatpush.bf16.msra.mxu0 %v502
        %784 = vmatpush.bf16.msra.mxu0 %v499
        %785 = vmatpush.bf16.msra.mxu0 %v496
        %786 = vmatpush.bf16.msra.mxu0 %v493
        %787 = vmatpush.bf16.msra.mxu0 %v490
        %788 = vmatmul.bf16.gmra.mxu0 %v323
        %v789 = vpop.f32.mrf.mxu0
        %v790 = vadd.f32 %v394, %v789
        %v791 = vpop.f32.mrf.mxu0
        %v792 = vadd.f32 %v394, %v791
        %793 = vmatmul.bf16.gmra.mxu0 %v325
        %v794 = vpop.f32.mrf.mxu0
        %v795 = vadd.f32 %v394, %v794
        %v796 = vpop.f32.mrf.mxu0
        %v797 = vadd.f32 %v394, %v796
        %798 = vmatmul.bf16.gmra.mxu0 %v327
        %v799 = vpop.f32.mrf.mxu0
        %v800 = vadd.f32 %v394, %v799
        %v801 = vpop.f32.mrf.mxu0
        %v802 = vadd.f32 %v394, %v801
        %803 = vmatmul.bf16.gmra.mxu0 %v329
        %v804 = vpop.f32.mrf.mxu0
        %v805 = vadd.f32 %v394, %v804
        %v806 = vpop.f32.mrf.mxu0
        %v807 = vadd.f32 %v394, %v806
        %808 = vmatmul.bf16.gmra.mxu0 %v331
        %v809 = vpop.f32.mrf.mxu0
        %v810 = vadd.f32 %v394, %v809
        %v811 = vpop.f32.mrf.mxu0
        %v812 = vadd.f32 %v394, %v811
        %813 = vmatmul.bf16.gmra.mxu0 %v333
        %v814 = vpop.f32.mrf.mxu0
        %v815 = vadd.f32 %v394, %v814
        %v816 = vpop.f32.mrf.mxu0
        %v817 = vadd.f32 %v394, %v816
        %818 = vmatmul.bf16.gmra.mxu0 %v335
        %v819 = vpop.f32.mrf.mxu0
        %v820 = vadd.f32 %v394, %v819
        %v821 = vpop.f32.mrf.mxu0
        %v822 = vadd.f32 %v394, %v821
        %823 = vmatmul.bf16.gmra.mxu0 %v337
        %v824 = vpop.f32.mrf.mxu0
        %v825 = vadd.f32 %v394, %v824
        %v826 = vpop.f32.mrf.mxu0
        %v827 = vadd.f32 %v394, %v826
        %828 = vmatmul.bf16.gmra.mxu0 %v339
        %v829 = vpop.f32.mrf.mxu0
        %v830 = vadd.f32 %v394, %v829
        %v831 = vpop.f32.mrf.mxu0
        %v832 = vadd.f32 %v394, %v831
        %833 = vmatmul.bf16.gmra.mxu0 %v341
        %v834 = vpop.f32.mrf.mxu0
        %v835 = vadd.f32 %v394, %v834
        %v836 = vpop.f32.mrf.mxu0
        %v837 = vadd.f32 %v394, %v836
        %838 = vmatmul.bf16.gmra.mxu0 %v343
        %v839 = vpop.f32.mrf.mxu0
        %v840 = vadd.f32 %v394, %v839
        %v841 = vpop.f32.mrf.mxu0
        %v842 = vadd.f32 %v394, %v841
        %843 = vmatmul.bf16.gmra.mxu0 %v345
        %v844 = vpop.f32.mrf.mxu0
        %v845 = vadd.f32 %v394, %v844
        %v846 = vpop.f32.mrf.mxu0
        %v847 = vadd.f32 %v394, %v846
        %848 = vmatmul.bf16.gmra.mxu0 %v347
        %v849 = vpop.f32.mrf.mxu0
        %v850 = vadd.f32 %v394, %v849
        %v851 = vpop.f32.mrf.mxu0
        %v852 = vadd.f32 %v394, %v851
        %853 = vmatmul.bf16.gmra.mxu0 %v349
        %v854 = vpop.f32.mrf.mxu0
        %v855 = vadd.f32 %v394, %v854
        %v856 = vpop.f32.mrf.mxu0
        %v857 = vadd.f32 %v394, %v856
        %858 = vmatmul.bf16.gmra.mxu0 %v351
        %v859 = vpop.f32.mrf.mxu0
        %v860 = vadd.f32 %v394, %v859
        %v861 = vpop.f32.mrf.mxu0
        %v862 = vadd.f32 %v394, %v861
        %863 = vmatmul.bf16.gmra.mxu0 %v353
        %v864 = vpop.f32.mrf.mxu0
        %v865 = vadd.f32 %v394, %v864
        %v866 = vpop.f32.mrf.mxu0
        %v867 = vadd.f32 %v394, %v866
        %868 = vdwg.mxu0
        %869 = vmatpush.bf16.msra.mxu0 0
        %870 = vmatpush.bf16.msra.mxu0 0
        %871 = vmatpush.bf16.msra.mxu0 0
        %872 = vmatpush.bf16.msra.mxu0 0
        %873 = vmatpush.bf16.msra.mxu0 0
        %874 = vmatpush.bf16.msra.mxu0 0
        %875 = vmatpush.bf16.msra.mxu0 0
        %876 = vmatpush.bf16.msra.mxu0 %v597
        %877 = vmatmul.bf16.gmra.mxu0 %v542
        %v878 = vpop.f32.mrf.mxu0
        %v879 = vadd.f32 %v790, %v878
        %v880 = vpop.f32.mrf.mxu0
        %v881 = vadd.f32 %v792, %v880
        %882 = vmatmul.bf16.gmra.mxu0 %v545
        %v883 = vpop.f32.mrf.mxu0
        %v884 = vadd.f32 %v795, %v883
        %v885 = vpop.f32.mrf.mxu0
        %v886 = vadd.f32 %v797, %v885
        %887 = vmatmul.bf16.gmra.mxu0 %v548
        %v888 = vpop.f32.mrf.mxu0
        %v889 = vadd.f32 %v800, %v888
        %v890 = vpop.f32.mrf.mxu0
        %v891 = vadd.f32 %v802, %v890
        %892 = vmatmul.bf16.gmra.mxu0 %v551
        %v893 = vpop.f32.mrf.mxu0
        %v894 = vadd.f32 %v805, %v893
        %v895 = vpop.f32.mrf.mxu0
        %v896 = vadd.f32 %v807, %v895
        %897 = vmatmul.bf16.gmra.mxu0 %v554
        %v898 = vpop.f32.mrf.mxu0
        %v899 = vadd.f32 %v810, %v898
        %v900 = vpop.f32.mrf.mxu0
        %v901 = vadd.f32 %v812, %v900
        %902 = vmatmul.bf16.gmra.mxu0 %v557
        %v903 = vpop.f32.mrf.mxu0
        %v904 = vadd.f32 %v815, %v903
        %v905 = vpop.f32.mrf.mxu0
        %v906 = vadd.f32 %v817, %v905
        %907 = vmatmul.bf16.gmra.mxu0 %v560
        %v908 = vpop.f32.mrf.mxu0
        %v909 = vadd.f32 %v820, %v908
        %v910 = vpop.f32.mrf.mxu0
        %v911 = vadd.f32 %v822, %v910
        %912 = vmatmul.bf16.gmra.mxu0 %v563
        %v913 = vpop.f32.mrf.mxu0
        %v914 = vadd.f32 %v825, %v913
        %v915 = vpop.f32.mrf.mxu0
        %v916 = vadd.f32 %v827, %v915
        %917 = vmatmul.bf16.gmra.mxu0 %v566
        %v918 = vpop.f32.mrf.mxu0
        %v919 = vadd.f32 %v830, %v918
        %v920 = vpop.f32.mrf.mxu0
        %v921 = vadd.f32 %v832, %v920
        %922 = vmatmul.bf16.gmra.mxu0 %v569
        %v923 = vpop.f32.mrf.mxu0
        %v924 = vadd.f32 %v835, %v923
        %v925 = vpop.f32.mrf.mxu0
        %v926 = vadd.f32 %v837, %v925
        %927 = vmatmul.bf16.gmra.mxu0 %v572
        %v928 = vpop.f32.mrf.mxu0
        %v929 = vadd.f32 %v840, %v928
        %v930 = vpop.f32.mrf.mxu0
        %v931 = vadd.f32 %v842, %v930
        %932 = vmatmul.bf16.gmra.mxu0 %v575
        %v933 = vpop.f32.mrf.mxu0
        %v934 = vadd.f32 %v845, %v933
        %v935 = vpop.f32.mrf.mxu0
        %v936 = vadd.f32 %v847, %v935
        %937 = vmatmul.bf16.gmra.mxu0 %v578
        %v938 = vpop.f32.mrf.mxu0
        %v939 = vadd.f32 %v850, %v938
        %v940 = vpop.f32.mrf.mxu0
        %v941 = vadd.f32 %v852, %v940
        %942 = vmatmul.bf16.gmra.mxu0 %v581
        %v943 = vpop.f32.mrf.mxu0
        %v944 = vadd.f32 %v855, %v943
        %v945 = vpop.f32.mrf.mxu0
        %v946 = vadd.f32 %v857, %v945
        %947 = vmatmul.bf16.gmra.mxu0 %v584
        %v948 = vpop.f32.mrf.mxu0
        %v949 = vadd.f32 %v860, %v948
        %v950 = vpop.f32.mrf.mxu0
        %v951 = vadd.f32 %v862, %v950
        %952 = vmatmul.bf16.gmra.mxu0 %v587
        %v953 = vpop.f32.mrf.mxu0
        %v954 = vadd.f32 %v865, %v953
        %v955 = vpop.f32.mrf.mxu0
        %v956 = vadd.f32 %v867, %v955
        %957 = vdwg.mxu0
        %958 = vmatpush.bf16.msra.mxu0 %v512
        %959 = vmatpush.bf16.msra.mxu0 %v509
        %960 = vmatpush.bf16.msra.mxu0 %v506
        %961 = vmatpush.bf16.msra.mxu0 %v503
        %962 = vmatpush.bf16.msra.mxu0 %v500
        %963 = vmatpush.bf16.msra.mxu0 %v497
        %964 = vmatpush.bf16.msra.mxu0 %v494
        %965 = vmatpush.bf16.msra.mxu0 %v491
        %966 = vmatmul.bf16.gmra.mxu0 %v323
        %v967 = vpop.f32.mrf.mxu0
        %v968 = vadd.f32 %v395, %v967
        %v969 = vpop.f32.mrf.mxu0
        %v970 = vadd.f32 %v395, %v969
        %971 = vmatmul.bf16.gmra.mxu0 %v325
        %v972 = vpop.f32.mrf.mxu0
        %v973 = vadd.f32 %v395, %v972
        %v974 = vpop.f32.mrf.mxu0
        %v975 = vadd.f32 %v395, %v974
        %976 = vmatmul.bf16.gmra.mxu0 %v327
        %v977 = vpop.f32.mrf.mxu0
        %v978 = vadd.f32 %v395, %v977
        %v979 = vpop.f32.mrf.mxu0
        %v980 = vadd.f32 %v395, %v979
        %981 = vmatmul.bf16.gmra.mxu0 %v329
        %v982 = vpop.f32.mrf.mxu0
        %v983 = vadd.f32 %v395, %v982
        %v984 = vpop.f32.mrf.mxu0
        %v985 = vadd.f32 %v395, %v984
        %986 = vmatmul.bf16.gmra.mxu0 %v331
        %v987 = vpop.f32.mrf.mxu0
        %v988 = vadd.f32 %v395, %v987
        %v989 = vpop.f32.mrf.mxu0
        %v990 = vadd.f32 %v395, %v989
        %991 = vmatmul.bf16.gmra.mxu0 %v333
        %v992 = vpop.f32.mrf.mxu0
        %v993 = vadd.f32 %v395, %v992
        %v994 = vpop.f32.mrf.mxu0
        %v995 = vadd.f32 %v395, %v994
        %996 = vmatmul.bf16.gmra.mxu0 %v335
        %v997 = vpop.f32.mrf.mxu0
        %v998 = vadd.f32 %v395, %v997
        %v999 = vpop.f32.mrf.mxu0
        %v1000 = vadd.f32 %v395, %v999
        %1001 = vmatmul.bf16.gmra.mxu0 %v337
        %v1002 = vpop.f32.mrf.mxu0
        %v1003 = vadd.f32 %v395, %v1002
        %v1004 = vpop.f32.mrf.mxu0
        %v1005 = vadd.f32 %v395, %v1004
        %1006 = vmatmul.bf16.gmra.mxu0 %v339
        %v1007 = vpop.f32.mrf.mxu0
        %v1008 = vadd.f32 %v395, %v1007
        %v1009 = vpop.f32.mrf.mxu0
        %v1010 = vadd.f32 %v395, %v1009
        %1011 = vmatmul.bf16.gmra.mxu0 %v341
        %v1012 = vpop.f32.mrf.mxu0
        %v1013 = vadd.f32 %v395, %v1012
        %v1014 = vpop.f32.mrf.mxu0
        %v1015 = vadd.f32 %v395, %v1014
        %1016 = vmatmul.bf16.gmra.mxu0 %v343
        %v1017 = vpop.f32.mrf.mxu0
        %v1018 = vadd.f32 %v395, %v1017
        %v1019 = vpop.f32.mrf.mxu0
        %v1020 = vadd.f32 %v395, %v1019
        %1021 = vmatmul.bf16.gmra.mxu0 %v345
        %v1022 = vpop.f32.mrf.mxu0
        %v1023 = vadd.f32 %v395, %v1022
        %v1024 = vpop.f32.mrf.mxu0
        %v1025 = vadd.f32 %v395, %v1024
        %1026 = vmatmul.bf16.gmra.mxu0 %v347
        %v1027 = vpop.f32.mrf.mxu0
        %v1028 = vadd.f32 %v395, %v1027
        %v1029 = vpop.f32.mrf.mxu0
        %v1030 = vadd.f32 %v395, %v1029
        %1031 = vmatmul.bf16.gmra.mxu0 %v349
        %v1032 = vpop.f32.mrf.mxu0
        %v1033 = vadd.f32 %v395, %v1032
        %v1034 = vpop.f32.mrf.mxu0
        %v1035 = vadd.f32 %v395, %v1034
        %1036 = vmatmul.bf16.gmra.mxu0 %v351
        %v1037 = vpop.f32.mrf.mxu0
        %v1038 = vadd.f32 %v395, %v1037
        %v1039 = vpop.f32.mrf.mxu0
        %v1040 = vadd.f32 %v395, %v1039
        %1041 = vmatmul.bf16.gmra.mxu0 %v353
        %v1042 = vpop.f32.mrf.mxu0
        %v1043 = vadd.f32 %v395, %v1042
        %v1044 = vpop.f32.mrf.mxu0
        %v1045 = vadd.f32 %v395, %v1044
        %1046 = vdwg.mxu0
        %1047 = vmatpush.bf16.msra.mxu0 0
        %1048 = vmatpush.bf16.msra.mxu0 0
        %1049 = vmatpush.bf16.msra.mxu0 0
        %1050 = vmatpush.bf16.msra.mxu0 0
        %1051 = vmatpush.bf16.msra.mxu0 0
        %1052 = vmatpush.bf16.msra.mxu0 0
        %1053 = vmatpush.bf16.msra.mxu0 0
        %1054 = vmatpush.bf16.msra.mxu0 %v600
        %1055 = vmatmul.bf16.gmra.mxu0 %v542
        %v1056 = vpop.f32.mrf.mxu0
        %v1057 = vadd.f32 %v968, %v1056
        %v1058 = vpop.f32.mrf.mxu0
        %v1059 = vadd.f32 %v970, %v1058
        %1060 = vmatmul.bf16.gmra.mxu0 %v545
        %v1061 = vpop.f32.mrf.mxu0
        %v1062 = vadd.f32 %v973, %v1061
        %v1063 = vpop.f32.mrf.mxu0
        %v1064 = vadd.f32 %v975, %v1063
        %1065 = vmatmul.bf16.gmra.mxu0 %v548
        %v1066 = vpop.f32.mrf.mxu0
        %v1067 = vadd.f32 %v978, %v1066
        %v1068 = vpop.f32.mrf.mxu0
        %v1069 = vadd.f32 %v980, %v1068
        %1070 = vmatmul.bf16.gmra.mxu0 %v551
        %v1071 = vpop.f32.mrf.mxu0
        %v1072 = vadd.f32 %v983, %v1071
        %v1073 = vpop.f32.mrf.mxu0
        %v1074 = vadd.f32 %v985, %v1073
        %1075 = vmatmul.bf16.gmra.mxu0 %v554
        %v1076 = vpop.f32.mrf.mxu0
        %v1077 = vadd.f32 %v988, %v1076
        %v1078 = vpop.f32.mrf.mxu0
        %v1079 = vadd.f32 %v990, %v1078
        %1080 = vmatmul.bf16.gmra.mxu0 %v557
        %v1081 = vpop.f32.mrf.mxu0
        %v1082 = vadd.f32 %v993, %v1081
        %v1083 = vpop.f32.mrf.mxu0
        %v1084 = vadd.f32 %v995, %v1083
        %1085 = vmatmul.bf16.gmra.mxu0 %v560
        %v1086 = vpop.f32.mrf.mxu0
        %v1087 = vadd.f32 %v998, %v1086
        %v1088 = vpop.f32.mrf.mxu0
        %v1089 = vadd.f32 %v1000, %v1088
        %1090 = vmatmul.bf16.gmra.mxu0 %v563
        %v1091 = vpop.f32.mrf.mxu0
        %v1092 = vadd.f32 %v1003, %v1091
        %v1093 = vpop.f32.mrf.mxu0
        %v1094 = vadd.f32 %v1005, %v1093
        %1095 = vmatmul.bf16.gmra.mxu0 %v566
        %v1096 = vpop.f32.mrf.mxu0
        %v1097 = vadd.f32 %v1008, %v1096
        %v1098 = vpop.f32.mrf.mxu0
        %v1099 = vadd.f32 %v1010, %v1098
        %1100 = vmatmul.bf16.gmra.mxu0 %v569
        %v1101 = vpop.f32.mrf.mxu0
        %v1102 = vadd.f32 %v1013, %v1101
        %v1103 = vpop.f32.mrf.mxu0
        %v1104 = vadd.f32 %v1015, %v1103
        %1105 = vmatmul.bf16.gmra.mxu0 %v572
        %v1106 = vpop.f32.mrf.mxu0
        %v1107 = vadd.f32 %v1018, %v1106
        %v1108 = vpop.f32.mrf.mxu0
        %v1109 = vadd.f32 %v1020, %v1108
        %1110 = vmatmul.bf16.gmra.mxu0 %v575
        %v1111 = vpop.f32.mrf.mxu0
        %v1112 = vadd.f32 %v1023, %v1111
        %v1113 = vpop.f32.mrf.mxu0
        %v1114 = vadd.f32 %v1025, %v1113
        %1115 = vmatmul.bf16.gmra.mxu0 %v578
        %v1116 = vpop.f32.mrf.mxu0
        %v1117 = vadd.f32 %v1028, %v1116
        %v1118 = vpop.f32.mrf.mxu0
        %v1119 = vadd.f32 %v1030, %v1118
        %1120 = vmatmul.bf16.gmra.mxu0 %v581
        %v1121 = vpop.f32.mrf.mxu0
        %v1122 = vadd.f32 %v1033, %v1121
        %v1123 = vpop.f32.mrf.mxu0
        %v1124 = vadd.f32 %v1035, %v1123
        %1125 = vmatmul.bf16.gmra.mxu0 %v584
        %v1126 = vpop.f32.mrf.mxu0
        %v1127 = vadd.f32 %v1038, %v1126
        %v1128 = vpop.f32.mrf.mxu0
        %v1129 = vadd.f32 %v1040, %v1128
        %1130 = vmatmul.bf16.gmra.mxu0 %v587
        %v1131 = vpop.f32.mrf.mxu0
        %v1132 = vadd.f32 %v1043, %v1131
        %v1133 = vpop.f32.mrf.mxu0
        %v1134 = vadd.f32 %v1045, %v1133
        %1135 = vdwg.mxu0
        %v1136 = vmax.f32 %v701, 0.0
        %v1137 = vmax.f32 %v879, 0.0
        %v1138 = vmax.f32 %v1057, 0.0
        %v1139 = vmax.f32 %v703, 0.0
        %v1140 = vmax.f32 %v881, 0.0
        %v1141 = vmax.f32 %v1059, 0.0
        %v1142 = vmax.f32 %v706, 0.0
        %v1143 = vmax.f32 %v884, 0.0
        %v1144 = vmax.f32 %v1062, 0.0
        %v1145 = vmax.f32 %v708, 0.0
        %v1146 = vmax.f32 %v886, 0.0
        %v1147 = vmax.f32 %v1064, 0.0
        %v1148 = vmax.f32 %v711, 0.0
        %v1149 = vmax.f32 %v889, 0.0
        %v1150 = vmax.f32 %v1067, 0.0
        %v1151 = vmax.f32 %v713, 0.0
        %v1152 = vmax.f32 %v891, 0.0
        %v1153 = vmax.f32 %v1069, 0.0
        %v1154 = vmax.f32 %v716, 0.0
        %v1155 = vmax.f32 %v894, 0.0
        %v1156 = vmax.f32 %v1072, 0.0
        %v1157 = vmax.f32 %v718, 0.0
        %v1158 = vmax.f32 %v896, 0.0
        %v1159 = vmax.f32 %v1074, 0.0
        %v1160 = vmax.f32 %v721, 0.0
        %v1161 = vmax.f32 %v899, 0.0
        %v1162 = vmax.f32 %v1077, 0.0
        %v1163 = vmax.f32 %v723, 0.0
        %v1164 = vmax.f32 %v901, 0.0
        %v1165 = vmax.f32 %v1079, 0.0
        %v1166 = vmax.f32 %v726, 0.0
        %v1167 = vmax.f32 %v904, 0.0
        %v1168 = vmax.f32 %v1082, 0.0
        %v1169 = vmax.f32 %v728, 0.0
        %v1170 = vmax.f32 %v906, 0.0
        %v1171 = vmax.f32 %v1084, 0.0
        %v1172 = vmax.f32 %v731, 0.0
        %v1173 = vmax.f32 %v909, 0.0
        %v1174 = vmax.f32 %v1087, 0.0
        %v1175 = vmax.f32 %v733, 0.0
        %v1176 = vmax.f32 %v911, 0.0
        %v1177 = vmax.f32 %v1089, 0.0
        %v1178 = vmax.f32 %v736, 0.0
        %v1179 = vmax.f32 %v914, 0.0
        %v1180 = vmax.f32 %v1092, 0.0
        %v1181 = vmax.f32 %v738, 0.0
        %v1182 = vmax.f32 %v916, 0.0
        %v1183 = vmax.f32 %v1094, 0.0
        %v1184 = vmax.f32 %v741, 0.0
        %v1185 = vmax.f32 %v919, 0.0
        %v1186 = vmax.f32 %v1097, 0.0
        %v1187 = vmax.f32 %v743, 0.0
        %v1188 = vmax.f32 %v921, 0.0
        %v1189 = vmax.f32 %v1099, 0.0
        %v1190 = vmax.f32 %v746, 0.0
        %v1191 = vmax.f32 %v924, 0.0
        %v1192 = vmax.f32 %v1102, 0.0
        %v1193 = vmax.f32 %v748, 0.0
        %v1194 = vmax.f32 %v926, 0.0
        %v1195 = vmax.f32 %v1104, 0.0
        %v1196 = vmax.f32 %v751, 0.0
        %v1197 = vmax.f32 %v929, 0.0
        %v1198 = vmax.f32 %v1107, 0.0
        %v1199 = vmax.f32 %v753, 0.0
        %v1200 = vmax.f32 %v931, 0.0
        %v1201 = vmax.f32 %v1109, 0.0
        %v1202 = vmax.f32 %v756, 0.0
        %v1203 = vmax.f32 %v934, 0.0
        %v1204 = vmax.f32 %v1112, 0.0
        %v1205 = vmax.f32 %v758, 0.0
        %v1206 = vmax.f32 %v936, 0.0
        %v1207 = vmax.f32 %v1114, 0.0
        %v1208 = vmax.f32 %v761, 0.0
        %v1209 = vmax.f32 %v939, 0.0
        %v1210 = vmax.f32 %v1117, 0.0
        %v1211 = vmax.f32 %v763, 0.0
        %v1212 = vmax.f32 %v941, 0.0
        %v1213 = vmax.f32 %v1119, 0.0
        %v1214 = vmax.f32 %v766, 0.0
        %v1215 = vmax.f32 %v944, 0.0
        %v1216 = vmax.f32 %v1122, 0.0
        %v1217 = vmax.f32 %v768, 0.0
        %v1218 = vmax.f32 %v946, 0.0
        %v1219 = vmax.f32 %v1124, 0.0
        %v1220 = vmax.f32 %v771, 0.0
        %v1221 = vmax.f32 %v949, 0.0
        %v1222 = vmax.f32 %v1127, 0.0
        %v1223 = vmax.f32 %v773, 0.0
        %v1224 = vmax.f32 %v951, 0.0
        %v1225 = vmax.f32 %v1129, 0.0
        %v1226 = vmax.f32 %v776, 0.0
        %v1227 = vmax.f32 %v954, 0.0
        %v1228 = vmax.f32 %v1132, 0.0
        %v1229 = vmax.f32 %v778, 0.0
        %v1230 = vmax.f32 %v956, 0.0
        %v1231 = vmax.f32 %v1134, 0.0
        %v1232 = vpack.c.bf16 %v1137, %v1136
        %v1233 = vpack.c.bf16 %v1138, %v1138
        %v1234 = vpack.c.bf16 %v1140, %v1139
        %v1235 = vpack.c.bf16 %v1141, %v1141
        %v1236 = vpack.c.bf16 %v1143, %v1142
        %v1237 = vpack.c.bf16 %v1144, %v1144
        %v1238 = vpack.c.bf16 %v1146, %v1145
        %v1239 = vpack.c.bf16 %v1147, %v1147
        %v1240 = vpack.c.bf16 %v1149, %v1148
        %v1241 = vpack.c.bf16 %v1150, %v1150
        %v1242 = vpack.c.bf16 %v1152, %v1151
        %v1243 = vpack.c.bf16 %v1153, %v1153
        %v1244 = vpack.c.bf16 %v1155, %v1154
        %v1245 = vpack.c.bf16 %v1156, %v1156
        %v1246 = vpack.c.bf16 %v1158, %v1157
        %v1247 = vpack.c.bf16 %v1159, %v1159
        %v1248 = vpack.c.bf16 %v1161, %v1160
        %v1249 = vpack.c.bf16 %v1162, %v1162
        %v1250 = vpack.c.bf16 %v1164, %v1163
        %v1251 = vpack.c.bf16 %v1165, %v1165
        %v1252 = vpack.c.bf16 %v1167, %v1166
        %v1253 = vpack.c.bf16 %v1168, %v1168
        %v1254 = vpack.c.bf16 %v1170, %v1169
        %v1255 = vpack.c.bf16 %v1171, %v1171
        %v1256 = vpack.c.bf16 %v1173, %v1172
        %v1257 = vpack.c.bf16 %v1174, %v1174
        %v1258 = vpack.c.bf16 %v1176, %v1175
        %v1259 = vpack.c.bf16 %v1177, %v1177
        %v1260 = vpack.c.bf16 %v1179, %v1178
        %v1261 = vpack.c.bf16 %v1180, %v1180
        %v1262 = vpack.c.bf16 %v1182, %v1181
        %v1263 = vpack.c.bf16 %v1183, %v1183
        %v1264 = vpack.c.bf16 %v1185, %v1184
        %v1265 = vpack.c.bf16 %v1186, %v1186
        %v1266 = vpack.c.bf16 %v1188, %v1187
        %v1267 = vpack.c.bf16 %v1189, %v1189
        %v1268 = vpack.c.bf16 %v1191, %v1190
        %v1269 = vpack.c.bf16 %v1192, %v1192
        %v1270 = vpack.c.bf16 %v1194, %v1193
        %v1271 = vpack.c.bf16 %v1195, %v1195
        %v1272 = vpack.c.bf16 %v1197, %v1196
        %v1273 = vpack.c.bf16 %v1198, %v1198
        %v1274 = vpack.c.bf16 %v1200, %v1199
        %v1275 = vpack.c.bf16 %v1201, %v1201
        %v1276 = vpack.c.bf16 %v1203, %v1202
        %v1277 = vpack.c.bf16 %v1204, %v1204
        %v1278 = vpack.c.bf16 %v1206, %v1205
        %v1279 = vpack.c.bf16 %v1207, %v1207
        %v1280 = vpack.c.bf16 %v1209, %v1208
        %v1281 = vpack.c.bf16 %v1210, %v1210
        %v1282 = vpack.c.bf16 %v1212, %v1211
        %v1283 = vpack.c.bf16 %v1213, %v1213
        %v1284 = vpack.c.bf16 %v1215, %v1214
        %v1285 = vpack.c.bf16 %v1216, %v1216
        %v1286 = vpack.c.bf16 %v1218, %v1217
        %v1287 = vpack.c.bf16 %v1219, %v1219
        %v1288 = vpack.c.bf16 %v1221, %v1220
        %v1289 = vpack.c.bf16 %v1222, %v1222
        %v1290 = vpack.c.bf16 %v1224, %v1223
        %v1291 = vpack.c.bf16 %v1225, %v1225
        %v1292 = vpack.c.bf16 %v1227, %v1226
        %v1293 = vpack.c.bf16 %v1228, %v1228
        %v1294 = vpack.c.bf16 %v1230, %v1229
        %v1295 = vpack.c.bf16 %v1231, %v1231
        %v1296 = vld [vmem:[%s3] sm:$0x7]
        %v1298 = vperm.slane %v1296, 0
        %v1299 = vperm.slane %v1296, 1
        %v1300 = vperm.slane %v1296, 2
        %v1304 = vpack.c.bf16 %v1299, %v1298
        %v1305 = vpack.c.bf16 %v1300, %v1300
        %v1308 = vunpack.c.l.b16 %v1304
        %v1309 = vunpack.c.h.b16 %v1304
        %v1310 = vunpack.c.l.b16 %v1305
        %v1311 = vpack.c.b16 %v1308, %v1308
        %v1312 = vpack.c.b16 %v1309, %v1309
        %v1313 = vpack.c.b16 %v1310, %v1310
        %v1315 = vpack.i.b16 %v1311, %v1311
        %v1317 = vperm.slane %v1315, 0
        %v1319 = vpack.i.b16 %v1312, %v1312
        %v1321 = vperm.slane %v1319, 0
        %v1323 = vpack.i.b16 %v1313, %v1313
        %v1325 = vperm.slane %v1323, 0
        %v1326 = vunpack.c.l.bf16 %v1232
        %v1327 = vunpack.c.h.bf16 %v1232
        %v1328 = vunpack.c.l.bf16 %v1233
        %v1329 = vunpack.c.l.bf16 %v1234
        %v1330 = vunpack.c.h.bf16 %v1234
        %v1331 = vunpack.c.l.bf16 %v1235
        %v1332 = vunpack.c.l.bf16 %v1236
        %v1333 = vunpack.c.h.bf16 %v1236
        %v1334 = vunpack.c.l.bf16 %v1237
        %v1335 = vunpack.c.l.bf16 %v1238
        %v1336 = vunpack.c.h.bf16 %v1238
        %v1337 = vunpack.c.l.bf16 %v1239
        %v1338 = vunpack.c.l.bf16 %v1240
        %v1339 = vunpack.c.h.bf16 %v1240
        %v1340 = vunpack.c.l.bf16 %v1241
        %v1341 = vunpack.c.l.bf16 %v1242
        %v1342 = vunpack.c.h.bf16 %v1242
        %v1343 = vunpack.c.l.bf16 %v1243
        %v1344 = vunpack.c.l.bf16 %v1244
        %v1345 = vunpack.c.h.bf16 %v1244
        %v1346 = vunpack.c.l.bf16 %v1245
        %v1347 = vunpack.c.l.bf16 %v1246
        %v1348 = vunpack.c.h.bf16 %v1246
        %v1349 = vunpack.c.l.bf16 %v1247
        %v1350 = vunpack.c.l.bf16 %v1248
        %v1351 = vunpack.c.h.bf16 %v1248
        %v1352 = vunpack.c.l.bf16 %v1249
        %v1353 = vunpack.c.l.bf16 %v1250
        %v1354 = vunpack.c.h.bf16 %v1250
        %v1355 = vunpack.c.l.bf16 %v1251
        %v1356 = vunpack.c.l.bf16 %v1252
        %v1357 = vunpack.c.h.bf16 %v1252
        %v1358 = vunpack.c.l.bf16 %v1253
        %v1359 = vunpack.c.l.bf16 %v1254
        %v1360 = vunpack.c.h.bf16 %v1254
        %v1361 = vunpack.c.l.bf16 %v1255
        %v1362 = vunpack.c.l.bf16 %v1256
        %v1363 = vunpack.c.h.bf16 %v1256
        %v1364 = vunpack.c.l.bf16 %v1257
        %v1365 = vunpack.c.l.bf16 %v1258
        %v1366 = vunpack.c.h.bf16 %v1258
        %v1367 = vunpack.c.l.bf16 %v1259
        %v1368 = vunpack.c.l.bf16 %v1260
        %v1369 = vunpack.c.h.bf16 %v1260
        %v1370 = vunpack.c.l.bf16 %v1261
        %v1371 = vunpack.c.l.bf16 %v1262
        %v1372 = vunpack.c.h.bf16 %v1262
        %v1373 = vunpack.c.l.bf16 %v1263
        %v1374 = vunpack.c.l.bf16 %v1264
        %v1375 = vunpack.c.h.bf16 %v1264
        %v1376 = vunpack.c.l.bf16 %v1265
        %v1377 = vunpack.c.l.bf16 %v1266
        %v1378 = vunpack.c.h.bf16 %v1266
        %v1379 = vunpack.c.l.bf16 %v1267
        %v1380 = vunpack.c.l.bf16 %v1268
        %v1381 = vunpack.c.h.bf16 %v1268
        %v1382 = vunpack.c.l.bf16 %v1269
        %v1383 = vunpack.c.l.bf16 %v1270
        %v1384 = vunpack.c.h.bf16 %v1270
        %v1385 = vunpack.c.l.bf16 %v1271
        %v1386 = vunpack.c.l.bf16 %v1272
        %v1387 = vunpack.c.h.bf16 %v1272
        %v1388 = vunpack.c.l.bf16 %v1273
        %v1389 = vunpack.c.l.bf16 %v1274
        %v1390 = vunpack.c.h.bf16 %v1274
        %v1391 = vunpack.c.l.bf16 %v1275
        %v1392 = vunpack.c.l.bf16 %v1276
        %v1393 = vunpack.c.h.bf16 %v1276
        %v1394 = vunpack.c.l.bf16 %v1277
        %v1395 = vunpack.c.l.bf16 %v1278
        %v1396 = vunpack.c.h.bf16 %v1278
        %v1397 = vunpack.c.l.bf16 %v1279
        %v1398 = vunpack.c.l.bf16 %v1280
        %v1399 = vunpack.c.h.bf16 %v1280
        %v1400 = vunpack.c.l.bf16 %v1281
        %v1401 = vunpack.c.l.bf16 %v1282
        %v1402 = vunpack.c.h.bf16 %v1282
        %v1403 = vunpack.c.l.bf16 %v1283
        %v1404 = vunpack.c.l.bf16 %v1284
        %v1405 = vunpack.c.h.bf16 %v1284
        %v1406 = vunpack.c.l.bf16 %v1285
        %v1407 = vunpack.c.l.bf16 %v1286
        %v1408 = vunpack.c.h.bf16 %v1286
        %v1409 = vunpack.c.l.bf16 %v1287
        %v1410 = vunpack.c.l.bf16 %v1288
        %v1411 = vunpack.c.h.bf16 %v1288
        %v1412 = vunpack.c.l.bf16 %v1289
        %v1413 = vunpack.c.l.bf16 %v1290
        %v1414 = vunpack.c.h.bf16 %v1290
        %v1415 = vunpack.c.l.bf16 %v1291
        %v1416 = vunpack.c.l.bf16 %v1292
        %v1417 = vunpack.c.h.bf16 %v1292
        %v1418 = vunpack.c.l.bf16 %v1293
        %v1419 = vunpack.c.l.bf16 %v1294
        %v1420 = vunpack.c.h.bf16 %v1294
        %v1421 = vunpack.c.l.bf16 %v1295
        %v1422 = vunpack.c.l.bf16 %v1317
        %v1423 = vunpack.c.l.bf16 %v1321
        %v1424 = vunpack.c.l.bf16 %v1325
        %v1425 = vmul.f32 %v1326, %v1422
        %v1426 = vmul.f32 %v1327, %v1423
        %v1427 = vmul.f32 %v1328, %v1424
        %v1428 = vmul.f32 %v1329, %v1422
        %v1429 = vmul.f32 %v1330, %v1423
        %v1430 = vmul.f32 %v1331, %v1424
        %v1431 = vmul.f32 %v1332, %v1422
        %v1432 = vmul.f32 %v1333, %v1423
        %v1433 = vmul.f32 %v1334, %v1424
        %v1434 = vmul.f32 %v1335, %v1422
        %v1435 = vmul.f32 %v1336, %v1423
        %v1436 = vmul.f32 %v1337, %v1424
        %v1437 = vmul.f32 %v1338, %v1422
        %v1438 = vmul.f32 %v1339, %v1423
        %v1439 = vmul.f32 %v1340, %v1424
        %v1440 = vmul.f32 %v1341, %v1422
        %v1441 = vmul.f32 %v1342, %v1423
        %v1442 = vmul.f32 %v1343, %v1424
        %v1443 = vmul.f32 %v1344, %v1422
        %v1444 = vmul.f32 %v1345, %v1423
        %v1445 = vmul.f32 %v1346, %v1424
        %v1446 = vmul.f32 %v1347, %v1422
        %v1447 = vmul.f32 %v1348, %v1423
        %v1448 = vmul.f32 %v1349, %v1424
        %v1449 = vmul.f32 %v1350, %v1422
        %v1450 = vmul.f32 %v1351, %v1423
        %v1451 = vmul.f32 %v1352, %v1424
        %v1452 = vmul.f32 %v1353, %v1422
        %v1453 = vmul.f32 %v1354, %v1423
        %v1454 = vmul.f32 %v1355, %v1424
        %v1455 = vmul.f32 %v1356, %v1422
        %v1456 = vmul.f32 %v1357, %v1423
        %v1457 = vmul.f32 %v1358, %v1424
        %v1458 = vmul.f32 %v1359, %v1422
        %v1459 = vmul.f32 %v1360, %v1423
        %v1460 = vmul.f32 %v1361, %v1424
        %v1461 = vmul.f32 %v1362, %v1422
        %v1462 = vmul.f32 %v1363, %v1423
        %v1463 = vmul.f32 %v1364, %v1424
        %v1464 = vmul.f32 %v1365, %v1422
        %v1465 = vmul.f32 %v1366, %v1423
        %v1466 = vmul.f32 %v1367, %v1424
        %v1467 = vmul.f32 %v1368, %v1422
        %v1468 = vmul.f32 %v1369, %v1423
        %v1469 = vmul.f32 %v1370, %v1424
        %v1470 = vmul.f32 %v1371, %v1422
        %v1471 = vmul.f32 %v1372, %v1423
        %v1472 = vmul.f32 %v1373, %v1424
        %v1473 = vmul.f32 %v1374, %v1422
        %v1474 = vmul.f32 %v1375, %v1423
        %v1475 = vmul.f32 %v1376, %v1424
        %v1476 = vmul.f32 %v1377, %v1422
        %v1477 = vmul.f32 %v1378, %v1423
        %v1478 = vmul.f32 %v1379, %v1424
        %v1479 = vmul.f32 %v1380, %v1422
        %v1480 = vmul.f32 %v1381, %v1423
        %v1481 = vmul.f32 %v1382, %v1424
        %v1482 = vmul.f32 %v1383, %v1422
        %v1483 = vmul.f32 %v1384, %v1423
        %v1484 = vmul.f32 %v1385, %v1424
        %v1485 = vmul.f32 %v1386, %v1422
        %v1486 = vmul.f32 %v1387, %v1423
        %v1487 = vmul.f32 %v1388, %v1424
        %v1488 = vmul.f32 %v1389, %v1422
        %v1489 = vmul.f32 %v1390, %v1423
        %v1490 = vmul.f32 %v1391, %v1424
        %v1491 = vmul.f32 %v1392, %v1422
        %v1492 = vmul.f32 %v1393, %v1423
        %v1493 = vmul.f32 %v1394, %v1424
        %v1494 = vmul.f32 %v1395, %v1422
        %v1495 = vmul.f32 %v1396, %v1423
        %v1496 = vmul.f32 %v1397, %v1424
        %v1497 = vmul.f32 %v1398, %v1422
        %v1498 = vmul.f32 %v1399, %v1423
        %v1499 = vmul.f32 %v1400, %v1424
        %v1500 = vmul.f32 %v1401, %v1422
        %v1501 = vmul.f32 %v1402, %v1423
        %v1502 = vmul.f32 %v1403, %v1424
        %v1503 = vmul.f32 %v1404, %v1422
        %v1504 = vmul.f32 %v1405, %v1423
        %v1505 = vmul.f32 %v1406, %v1424
        %v1506 = vmul.f32 %v1407, %v1422
        %v1507 = vmul.f32 %v1408, %v1423
        %v1508 = vmul.f32 %v1409, %v1424
        %v1509 = vmul.f32 %v1410, %v1422
        %v1510 = vmul.f32 %v1411, %v1423
        %v1511 = vmul.f32 %v1412, %v1424
        %v1512 = vmul.f32 %v1413, %v1422
        %v1513 = vmul.f32 %v1414, %v1423
        %v1514 = vmul.f32 %v1415, %v1424
        %v1515 = vmul.f32 %v1416, %v1422
        %v1516 = vmul.f32 %v1417, %v1423
        %v1517 = vmul.f32 %v1418, %v1424
        %v1518 = vmul.f32 %v1419, %v1422
        %v1519 = vmul.f32 %v1420, %v1423
        %v1520 = vmul.f32 %v1421, %v1424
        %v1521 = vpack.c.bf16 %v1428, %v1425
        %v1522 = vpack.c.bf16 %v1429, %v1426
        %v1523 = vpack.c.bf16 %v1430, %v1427
        %v1524 = vpack.c.bf16 %v1434, %v1431
        %v1525 = vpack.c.bf16 %v1435, %v1432
        %v1526 = vpack.c.bf16 %v1436, %v1433
        %v1527 = vpack.c.bf16 %v1440, %v1437
        %v1528 = vpack.c.bf16 %v1441, %v1438
        %v1529 = vpack.c.bf16 %v1442, %v1439
        %v1530 = vpack.c.bf16 %v1446, %v1443
        %v1531 = vpack.c.bf16 %v1447, %v1444
        %v1532 = vpack.c.bf16 %v1448, %v1445
        %v1533 = vpack.c.bf16 %v1452, %v1449
        %v1534 = vpack.c.bf16 %v1453, %v1450
        %v1535 = vpack.c.bf16 %v1454, %v1451
        %v1536 = vpack.c.bf16 %v1458, %v1455
        %v1537 = vpack.c.bf16 %v1459, %v1456
        %v1538 = vpack.c.bf16 %v1460, %v1457
        %v1539 = vpack.c.bf16 %v1464, %v1461
        %v1540 = vpack.c.bf16 %v1465, %v1462
        %v1541 = vpack.c.bf16 %v1466, %v1463
        %v1542 = vpack.c.bf16 %v1470, %v1467
        %v1543 = vpack.c.bf16 %v1471, %v1468
        %v1544 = vpack.c.bf16 %v1472, %v1469
        %v1545 = vpack.c.bf16 %v1476, %v1473
        %v1546 = vpack.c.bf16 %v1477, %v1474
        %v1547 = vpack.c.bf16 %v1478, %v1475
        %v1548 = vpack.c.bf16 %v1482, %v1479
        %v1549 = vpack.c.bf16 %v1483, %v1480
        %v1550 = vpack.c.bf16 %v1484, %v1481
        %v1551 = vpack.c.bf16 %v1488, %v1485
        %v1552 = vpack.c.bf16 %v1489, %v1486
        %v1553 = vpack.c.bf16 %v1490, %v1487
        %v1554 = vpack.c.bf16 %v1494, %v1491
        %v1555 = vpack.c.bf16 %v1495, %v1492
        %v1556 = vpack.c.bf16 %v1496, %v1493
        %v1557 = vpack.c.bf16 %v1500, %v1497
        %v1558 = vpack.c.bf16 %v1501, %v1498
        %v1559 = vpack.c.bf16 %v1502, %v1499
        %v1560 = vpack.c.bf16 %v1506, %v1503
        %v1561 = vpack.c.bf16 %v1507, %v1504
        %v1562 = vpack.c.bf16 %v1508, %v1505
        %v1563 = vpack.c.bf16 %v1512, %v1509
        %v1564 = vpack.c.bf16 %v1513, %v1510
        %v1565 = vpack.c.bf16 %v1514, %v1511
        %v1566 = vpack.c.bf16 %v1518, %v1515
        %v1567 = vpack.c.bf16 %v1519, %v1516
        %v1568 = vpack.c.bf16 %v1520, %v1517
        %v1569 = vunpack.c.l.bf16 %v1521
        %v1570 = vunpack.c.l.bf16 %v1522
        %v1571 = vunpack.c.l.bf16 %v1523
        %v1572 = vunpack.c.h.bf16 %v1521
        %v1573 = vunpack.c.h.bf16 %v1522
        %v1574 = vunpack.c.h.bf16 %v1523
        %v1575 = vunpack.c.l.bf16 %v1524
        %v1576 = vunpack.c.l.bf16 %v1525
        %v1577 = vunpack.c.l.bf16 %v1526
        %v1578 = vunpack.c.h.bf16 %v1524
        %v1579 = vunpack.c.h.bf16 %v1525
        %v1580 = vunpack.c.h.bf16 %v1526
        %v1581 = vunpack.c.l.bf16 %v1527
        %v1582 = vunpack.c.l.bf16 %v1528
        %v1583 = vunpack.c.l.bf16 %v1529
        %v1584 = vunpack.c.h.bf16 %v1527
        %v1585 = vunpack.c.h.bf16 %v1528
        %v1586 = vunpack.c.h.bf16 %v1529
        %v1587 = vunpack.c.l.bf16 %v1530
        %v1588 = vunpack.c.l.bf16 %v1531
        %v1589 = vunpack.c.l.bf16 %v1532
        %v1590 = vunpack.c.h.bf16 %v1530
        %v1591 = vunpack.c.h.bf16 %v1531
        %v1592 = vunpack.c.h.bf16 %v1532
        %v1593 = vunpack.c.l.bf16 %v1533
        %v1594 = vunpack.c.l.bf16 %v1534
        %v1595 = vunpack.c.l.bf16 %v1535
        %v1596 = vunpack.c.h.bf16 %v1533
        %v1597 = vunpack.c.h.bf16 %v1534
        %v1598 = vunpack.c.h.bf16 %v1535
        %v1599 = vunpack.c.l.bf16 %v1536
        %v1600 = vunpack.c.l.bf16 %v1537
        %v1601 = vunpack.c.l.bf16 %v1538
        %v1602 = vunpack.c.h.bf16 %v1536
        %v1603 = vunpack.c.h.bf16 %v1537
        %v1604 = vunpack.c.h.bf16 %v1538
        %v1605 = vunpack.c.l.bf16 %v1539
        %v1606 = vunpack.c.l.bf16 %v1540
        %v1607 = vunpack.c.l.bf16 %v1541
        %v1608 = vunpack.c.h.bf16 %v1539
        %v1609 = vunpack.c.h.bf16 %v1540
        %v1610 = vunpack.c.h.bf16 %v1541
        %v1611 = vunpack.c.l.bf16 %v1542
        %v1612 = vunpack.c.l.bf16 %v1543
        %v1613 = vunpack.c.l.bf16 %v1544
        %v1614 = vunpack.c.h.bf16 %v1542
        %v1615 = vunpack.c.h.bf16 %v1543
        %v1616 = vunpack.c.h.bf16 %v1544
        %v1617 = vunpack.c.l.bf16 %v1545
        %v1618 = vunpack.c.l.bf16 %v1546
        %v1619 = vunpack.c.l.bf16 %v1547
        %v1620 = vunpack.c.h.bf16 %v1545
        %v1621 = vunpack.c.h.bf16 %v1546
        %v1622 = vunpack.c.h.bf16 %v1547
        %v1623 = vunpack.c.l.bf16 %v1548
        %v1624 = vunpack.c.l.bf16 %v1549
        %v1625 = vunpack.c.l.bf16 %v1550
        %v1626 = vunpack.c.h.bf16 %v1548
        %v1627 = vunpack.c.h.bf16 %v1549
        %v1628 = vunpack.c.h.bf16 %v1550
        %v1629 = vunpack.c.l.bf16 %v1551
        %v1630 = vunpack.c.l.bf16 %v1552
        %v1631 = vunpack.c.l.bf16 %v1553
        %v1632 = vunpack.c.h.bf16 %v1551
        %v1633 = vunpack.c.h.bf16 %v1552
        %v1634 = vunpack.c.h.bf16 %v1553
        %v1635 = vunpack.c.l.bf16 %v1554
        %v1636 = vunpack.c.l.bf16 %v1555
        %v1637 = vunpack.c.l.bf16 %v1556
        %v1638 = vunpack.c.h.bf16 %v1554
        %v1639 = vunpack.c.h.bf16 %v1555
        %v1640 = vunpack.c.h.bf16 %v1556
        %v1641 = vunpack.c.l.bf16 %v1557
        %v1642 = vunpack.c.l.bf16 %v1558
        %v1643 = vunpack.c.l.bf16 %v1559
        %v1644 = vunpack.c.h.bf16 %v1557
        %v1645 = vunpack.c.h.bf16 %v1558
        %v1646 = vunpack.c.h.bf16 %v1559
        %v1647 = vunpack.c.l.bf16 %v1560
        %v1648 = vunpack.c.l.bf16 %v1561
        %v1649 = vunpack.c.l.bf16 %v1562
        %v1650 = vunpack.c.h.bf16 %v1560
        %v1651 = vunpack.c.h.bf16 %v1561
        %v1652 = vunpack.c.h.bf16 %v1562
        %v1653 = vunpack.c.l.bf16 %v1563
        %v1654 = vunpack.c.l.bf16 %v1564
        %v1655 = vunpack.c.l.bf16 %v1565
        %v1656 = vunpack.c.h.bf16 %v1563
        %v1657 = vunpack.c.h.bf16 %v1564
        %v1658 = vunpack.c.h.bf16 %v1565
        %v1659 = vunpack.c.l.bf16 %v1566
        %v1660 = vunpack.c.l.bf16 %v1567
        %v1661 = vunpack.c.l.bf16 %v1568
        %v1662 = vunpack.c.h.bf16 %v1566
        %v1663 = vunpack.c.h.bf16 %v1567
        %v1664 = vunpack.c.h.bf16 %v1568
        %v1665 = vadd.f32 %v1569, %v1570
        %vm1666 = vcmask 523264
        %v1667 = vsel %vm1666, %v1571, 0.0
        %v1668 = vadd.f32 %v1665, %v1667
        %1669 = vadd.xlane.f32.xlu0 %v1668
        %v1670 = vpop.xlane.xlu0 %1669
        %v1671 = vadd.f32 %v1572, %v1573
        %v1672 = vsel %vm1666, %v1574, 0.0
        %v1673 = vadd.f32 %v1671, %v1672
        %1674 = vadd.xlane.f32.xlu0 %v1673
        %v1675 = vpop.xlane.xlu0 %1674
        %v1676 = vadd.f32 %v1575, %v1576
        %v1677 = vsel %vm1666, %v1577, 0.0
        %v1678 = vadd.f32 %v1676, %v1677
        %1679 = vadd.xlane.f32.xlu0 %v1678
        %v1680 = vpop.xlane.xlu0 %1679
        %v1681 = vadd.f32 %v1578, %v1579
        %v1682 = vsel %vm1666, %v1580, 0.0
        %v1683 = vadd.f32 %v1681, %v1682
        %1684 = vadd.xlane.f32.xlu0 %v1683
        %v1685 = vpop.xlane.xlu0 %1684
        %v1686 = vadd.f32 %v1581, %v1582
        %v1687 = vsel %vm1666, %v1583, 0.0
        %v1688 = vadd.f32 %v1686, %v1687
        %1689 = vadd.xlane.f32.xlu0 %v1688
        %v1690 = vpop.xlane.xlu0 %1689
        %v1691 = vadd.f32 %v1584, %v1585
        %v1692 = vsel %vm1666, %v1586, 0.0
        %v1693 = vadd.f32 %v1691, %v1692
        %1694 = vadd.xlane.f32.xlu0 %v1693
        %v1695 = vpop.xlane.xlu0 %1694
        %v1696 = vadd.f32 %v1587, %v1588
        %v1697 = vsel %vm1666, %v1589, 0.0
        %v1698 = vadd.f32 %v1696, %v1697
        %1699 = vadd.xlane.f32.xlu0 %v1698
        %v1700 = vpop.xlane.xlu0 %1699
        %v1701 = vadd.f32 %v1590, %v1591
        %v1702 = vsel %vm1666, %v1592, 0.0
        %v1703 = vadd.f32 %v1701, %v1702
        %1704 = vadd.xlane.f32.xlu0 %v1703
        %v1705 = vpop.xlane.xlu0 %1704
        %v1706 = vadd.f32 %v1593, %v1594
        %v1707 = vsel %vm1666, %v1595, 0.0
        %v1708 = vadd.f32 %v1706, %v1707
        %1709 = vadd.xlane.f32.xlu0 %v1708
        %v1710 = vpop.xlane.xlu0 %1709
        %v1711 = vadd.f32 %v1596, %v1597
        %v1712 = vsel %vm1666, %v1598, 0.0
        %v1713 = vadd.f32 %v1711, %v1712
        %1714 = vadd.xlane.f32.xlu0 %v1713
        %v1715 = vpop.xlane.xlu0 %1714
        %v1716 = vadd.f32 %v1599, %v1600
        %v1717 = vsel %vm1666, %v1601, 0.0
        %v1718 = vadd.f32 %v1716, %v1717
        %1719 = vadd.xlane.f32.xlu0 %v1718
        %v1720 = vpop.xlane.xlu0 %1719
        %v1721 = vadd.f32 %v1602, %v1603
        %v1722 = vsel %vm1666, %v1604, 0.0
        %v1723 = vadd.f32 %v1721, %v1722
        %1724 = vadd.xlane.f32.xlu0 %v1723
        %v1725 = vpop.xlane.xlu0 %1724
        %v1726 = vadd.f32 %v1605, %v1606
        %v1727 = vsel %vm1666, %v1607, 0.0
        %v1728 = vadd.f32 %v1726, %v1727
        %1729 = vadd.xlane.f32.xlu0 %v1728
        %v1730 = vpop.xlane.xlu0 %1729
        %v1731 = vadd.f32 %v1608, %v1609
        %v1732 = vsel %vm1666, %v1610, 0.0
        %v1733 = vadd.f32 %v1731, %v1732
        %1734 = vadd.xlane.f32.xlu0 %v1733
        %v1735 = vpop.xlane.xlu0 %1734
        %v1736 = vadd.f32 %v1611, %v1612
        %v1737 = vsel %vm1666, %v1613, 0.0
        %v1738 = vadd.f32 %v1736, %v1737
        %1739 = vadd.xlane.f32.xlu0 %v1738
        %v1740 = vpop.xlane.xlu0 %1739
        %v1741 = vadd.f32 %v1614, %v1615
        %v1742 = vsel %vm1666, %v1616, 0.0
        %v1743 = vadd.f32 %v1741, %v1742
        %1744 = vadd.xlane.f32.xlu0 %v1743
        %v1745 = vpop.xlane.xlu0 %1744
        %v1746 = vadd.f32 %v1617, %v1618
        %v1747 = vsel %vm1666, %v1619, 0.0
        %v1748 = vadd.f32 %v1746, %v1747
        %1749 = vadd.xlane.f32.xlu0 %v1748
        %v1750 = vpop.xlane.xlu0 %1749
        %v1751 = vadd.f32 %v1620, %v1621
        %v1752 = vsel %vm1666, %v1622, 0.0
        %v1753 = vadd.f32 %v1751, %v1752
        %1754 = vadd.xlane.f32.xlu0 %v1753
        %v1755 = vpop.xlane.xlu0 %1754
        %v1756 = vadd.f32 %v1623, %v1624
        %v1757 = vsel %vm1666, %v1625, 0.0
        %v1758 = vadd.f32 %v1756, %v1757
        %1759 = vadd.xlane.f32.xlu0 %v1758
        %v1760 = vpop.xlane.xlu0 %1759
        %v1761 = vadd.f32 %v1626, %v1627
        %v1762 = vsel %vm1666, %v1628, 0.0
        %v1763 = vadd.f32 %v1761, %v1762
        %1764 = vadd.xlane.f32.xlu0 %v1763
        %v1765 = vpop.xlane.xlu0 %1764
        %v1766 = vadd.f32 %v1629, %v1630
        %v1767 = vsel %vm1666, %v1631, 0.0
        %v1768 = vadd.f32 %v1766, %v1767
        %1769 = vadd.xlane.f32.xlu0 %v1768
        %v1770 = vpop.xlane.xlu0 %1769
        %v1771 = vadd.f32 %v1632, %v1633
        %v1772 = vsel %vm1666, %v1634, 0.0
        %v1773 = vadd.f32 %v1771, %v1772
        %1774 = vadd.xlane.f32.xlu0 %v1773
        %v1775 = vpop.xlane.xlu0 %1774
        %v1776 = vadd.f32 %v1635, %v1636
        %v1777 = vsel %vm1666, %v1637, 0.0
        %v1778 = vadd.f32 %v1776, %v1777
        %1779 = vadd.xlane.f32.xlu0 %v1778
        %v1780 = vpop.xlane.xlu0 %1779
        %v1781 = vadd.f32 %v1638, %v1639
        %v1782 = vsel %vm1666, %v1640, 0.0
        %v1783 = vadd.f32 %v1781, %v1782
        %1784 = vadd.xlane.f32.xlu0 %v1783
        %v1785 = vpop.xlane.xlu0 %1784
        %v1786 = vadd.f32 %v1641, %v1642
        %v1787 = vsel %vm1666, %v1643, 0.0
        %v1788 = vadd.f32 %v1786, %v1787
        %1789 = vadd.xlane.f32.xlu0 %v1788
        %v1790 = vpop.xlane.xlu0 %1789
        %v1791 = vadd.f32 %v1644, %v1645
        %v1792 = vsel %vm1666, %v1646, 0.0
        %v1793 = vadd.f32 %v1791, %v1792
        %1794 = vadd.xlane.f32.xlu0 %v1793
        %v1795 = vpop.xlane.xlu0 %1794
        %v1796 = vadd.f32 %v1647, %v1648
        %v1797 = vsel %vm1666, %v1649, 0.0
        %v1798 = vadd.f32 %v1796, %v1797
        %1799 = vadd.xlane.f32.xlu0 %v1798
        %v1800 = vpop.xlane.xlu0 %1799
        %v1801 = vadd.f32 %v1650, %v1651
        %v1802 = vsel %vm1666, %v1652, 0.0
        %v1803 = vadd.f32 %v1801, %v1802
        %1804 = vadd.xlane.f32.xlu0 %v1803
        %v1805 = vpop.xlane.xlu0 %1804
        %v1806 = vadd.f32 %v1653, %v1654
        %v1807 = vsel %vm1666, %v1655, 0.0
        %v1808 = vadd.f32 %v1806, %v1807
        %1809 = vadd.xlane.f32.xlu0 %v1808
        %v1810 = vpop.xlane.xlu0 %1809
        %v1811 = vadd.f32 %v1656, %v1657
        %v1812 = vsel %vm1666, %v1658, 0.0
        %v1813 = vadd.f32 %v1811, %v1812
        %1814 = vadd.xlane.f32.xlu0 %v1813
        %v1815 = vpop.xlane.xlu0 %1814
        %v1816 = vadd.f32 %v1659, %v1660
        %v1817 = vsel %vm1666, %v1661, 0.0
        %v1818 = vadd.f32 %v1816, %v1817
        %1819 = vadd.xlane.f32.xlu0 %v1818
        %v1820 = vpop.xlane.xlu0 %1819
        %v1821 = vadd.f32 %v1662, %v1663
        %v1822 = vsel %vm1666, %v1664, 0.0
        %v1823 = vadd.f32 %v1821, %v1822
        %1824 = vadd.xlane.f32.xlu0 %v1823
        %v1825 = vpop.xlane.xlu0 %1824
        %s1826 = sld [smem:[#allocation2]]
        %v1827 = vstv %s1826
        %v1828 = vadd.f32 %v1670, %v1827
        %v1829 = vadd.f32 %v1675, %v1827
        %v1830 = vadd.f32 %v1680, %v1827
        %v1831 = vadd.f32 %v1685, %v1827
        %v1832 = vadd.f32 %v1690, %v1827
        %v1833 = vadd.f32 %v1695, %v1827
        %v1834 = vadd.f32 %v1700, %v1827
        %v1835 = vadd.f32 %v1705, %v1827
        %v1836 = vadd.f32 %v1710, %v1827
        %v1837 = vadd.f32 %v1715, %v1827
        %v1838 = vadd.f32 %v1720, %v1827
        %v1839 = vadd.f32 %v1725, %v1827
        %v1840 = vadd.f32 %v1730, %v1827
        %v1841 = vadd.f32 %v1735, %v1827
        %v1842 = vadd.f32 %v1740, %v1827
        %v1843 = vadd.f32 %v1745, %v1827
        %v1844 = vadd.f32 %v1750, %v1827
        %v1845 = vadd.f32 %v1755, %v1827
        %v1846 = vadd.f32 %v1760, %v1827
        %v1847 = vadd.f32 %v1765, %v1827
        %v1848 = vadd.f32 %v1770, %v1827
        %v1849 = vadd.f32 %v1775, %v1827
        %v1850 = vadd.f32 %v1780, %v1827
        %v1851 = vadd.f32 %v1785, %v1827
        %v1852 = vadd.f32 %v1790, %v1827
        %v1853 = vadd.f32 %v1795, %v1827
        %v1854 = vadd.f32 %v1800, %v1827
        %v1855 = vadd.f32 %v1805, %v1827
        %v1856 = vadd.f32 %v1810, %v1827
        %v1857 = vadd.f32 %v1815, %v1827
        %v1858 = vadd.f32 %v1820, %v1827
        %v1859 = vadd.f32 %v1825, %v1827
        %v1892 = vperm.slane %v1828, 0
        %v1893 = vperm.slane %v1828, 1
        %v1894 = vperm.slane %v1828, 2
        %v1895 = vperm.slane %v1828, 3
        %v1896 = vperm.slane %v1828, 4
        %v1897 = vperm.slane %v1828, 5
        %v1898 = vperm.slane %v1828, 6
        %v1899 = vperm.slane %v1828, 7
        %v1900 = vperm.slane %v1829, 0
        %v1901 = vperm.slane %v1829, 1
        %v1902 = vperm.slane %v1829, 2
        %v1903 = vperm.slane %v1829, 3
        %v1904 = vperm.slane %v1829, 4
        %v1905 = vperm.slane %v1829, 5
        %v1906 = vperm.slane %v1829, 6
        %v1907 = vperm.slane %v1829, 7
        %v1908 = vperm.slane %v1830, 0
        %v1909 = vperm.slane %v1830, 1
        %v1910 = vperm.slane %v1830, 2
        %v1911 = vperm.slane %v1830, 3
        %v1912 = vperm.slane %v1830, 4
        %v1913 = vperm.slane %v1830, 5
        %v1914 = vperm.slane %v1830, 6
        %v1915 = vperm.slane %v1830, 7
        %v1916 = vperm.slane %v1831, 0
        %v1917 = vperm.slane %v1831, 1
        %v1918 = vperm.slane %v1831, 2
        %v1919 = vperm.slane %v1831, 3
        %v1920 = vperm.slane %v1831, 4
        %v1921 = vperm.slane %v1831, 5
        %v1922 = vperm.slane %v1831, 6
        %v1923 = vperm.slane %v1831, 7
        %v1924 = vperm.slane %v1832, 0
        %v1925 = vperm.slane %v1832, 1
        %v1926 = vperm.slane %v1832, 2
        %v1927 = vperm.slane %v1832, 3
        %v1928 = vperm.slane %v1832, 4
        %v1929 = vperm.slane %v1832, 5
        %v1930 = vperm.slane %v1832, 6
        %v1931 = vperm.slane %v1832, 7
        %v1932 = vperm.slane %v1833, 0
        %v1933 = vperm.slane %v1833, 1
        %v1934 = vperm.slane %v1833, 2
        %v1935 = vperm.slane %v1833, 3
        %v1936 = vperm.slane %v1833, 4
        %v1937 = vperm.slane %v1833, 5
        %v1938 = vperm.slane %v1833, 6
        %v1939 = vperm.slane %v1833, 7
        %v1940 = vperm.slane %v1834, 0
        %v1941 = vperm.slane %v1834, 1
        %v1942 = vperm.slane %v1834, 2
        %v1943 = vperm.slane %v1834, 3
        %v1944 = vperm.slane %v1834, 4
        %v1945 = vperm.slane %v1834, 5
        %v1946 = vperm.slane %v1834, 6
        %v1947 = vperm.slane %v1834, 7
        %v1948 = vperm.slane %v1835, 0
        %v1949 = vperm.slane %v1835, 1
        %v1950 = vperm.slane %v1835, 2
        %v1951 = vperm.slane %v1835, 3
        %v1952 = vperm.slane %v1835, 4
        %v1953 = vperm.slane %v1835, 5
        %v1954 = vperm.slane %v1835, 6
        %v1955 = vperm.slane %v1835, 7
        %v1956 = vperm.slane %v1836, 0
        %v1957 = vperm.slane %v1836, 1
        %v1958 = vperm.slane %v1836, 2
        %v1959 = vperm.slane %v1836, 3
        %v1960 = vperm.slane %v1836, 4
        %v1961 = vperm.slane %v1836, 5
        %v1962 = vperm.slane %v1836, 6
        %v1963 = vperm.slane %v1836, 7
        %v1964 = vperm.slane %v1837, 0
        %v1965 = vperm.slane %v1837, 1
        %v1966 = vperm.slane %v1837, 2
        %v1967 = vperm.slane %v1837, 3
        %v1968 = vperm.slane %v1837, 4
        %v1969 = vperm.slane %v1837, 5
        %v1970 = vperm.slane %v1837, 6
        %v1971 = vperm.slane %v1837, 7
        %v1972 = vperm.slane %v1838, 0
        %v1973 = vperm.slane %v1838, 1
        %v1974 = vperm.slane %v1838, 2
        %v1975 = vperm.slane %v1838, 3
        %v1976 = vperm.slane %v1838, 4
        %v1977 = vperm.slane %v1838, 5
        %v1978 = vperm.slane %v1838, 6
        %v1979 = vperm.slane %v1838, 7
        %v1980 = vperm.slane %v1839, 0
        %v1981 = vperm.slane %v1839, 1
        %v1982 = vperm.slane %v1839, 2
        %v1983 = vperm.slane %v1839, 3
        %v1984 = vperm.slane %v1839, 4
        %v1985 = vperm.slane %v1839, 5
        %v1986 = vperm.slane %v1839, 6
        %v1987 = vperm.slane %v1839, 7
        %v1988 = vperm.slane %v1840, 0
        %v1989 = vperm.slane %v1840, 1
        %v1990 = vperm.slane %v1840, 2
        %v1991 = vperm.slane %v1840, 3
        %v1992 = vperm.slane %v1840, 4
        %v1993 = vperm.slane %v1840, 5
        %v1994 = vperm.slane %v1840, 6
        %v1995 = vperm.slane %v1840, 7
        %v1996 = vperm.slane %v1841, 0
        %v1997 = vperm.slane %v1841, 1
        %v1998 = vperm.slane %v1841, 2
        %v1999 = vperm.slane %v1841, 3
        %v2000 = vperm.slane %v1841, 4
        %v2001 = vperm.slane %v1841, 5
        %v2002 = vperm.slane %v1841, 6
        %v2003 = vperm.slane %v1841, 7
        %v2004 = vperm.slane %v1842, 0
        %v2005 = vperm.slane %v1842, 1
        %v2006 = vperm.slane %v1842, 2
        %v2007 = vperm.slane %v1842, 3
        %v2008 = vperm.slane %v1842, 4
        %v2009 = vperm.slane %v1842, 5
        %v2010 = vperm.slane %v1842, 6
        %v2011 = vperm.slane %v1842, 7
        %v2012 = vperm.slane %v1843, 0
        %v2013 = vperm.slane %v1843, 1
        %v2014 = vperm.slane %v1843, 2
        %v2015 = vperm.slane %v1843, 3
        %v2016 = vperm.slane %v1843, 4
        %v2017 = vperm.slane %v1843, 5
        %v2018 = vperm.slane %v1843, 6
        %v2019 = vperm.slane %v1843, 7
        %v2020 = vperm.slane %v1844, 0
        %v2021 = vperm.slane %v1844, 1
        %v2022 = vperm.slane %v1844, 2
        %v2023 = vperm.slane %v1844, 3
        %v2024 = vperm.slane %v1844, 4
        %v2025 = vperm.slane %v1844, 5
        %v2026 = vperm.slane %v1844, 6
        %v2027 = vperm.slane %v1844, 7
        %v2028 = vperm.slane %v1845, 0
        %v2029 = vperm.slane %v1845, 1
        %v2030 = vperm.slane %v1845, 2
        %v2031 = vperm.slane %v1845, 3
        %v2032 = vperm.slane %v1845, 4
        %v2033 = vperm.slane %v1845, 5
        %v2034 = vperm.slane %v1845, 6
        %v2035 = vperm.slane %v1845, 7
        %v2036 = vperm.slane %v1846, 0
        %v2037 = vperm.slane %v1846, 1
        %v2038 = vperm.slane %v1846, 2
        %v2039 = vperm.slane %v1846, 3
        %v2040 = vperm.slane %v1846, 4
        %v2041 = vperm.slane %v1846, 5
        %v2042 = vperm.slane %v1846, 6
        %v2043 = vperm.slane %v1846, 7
        %v2044 = vperm.slane %v1847, 0
        %v2045 = vperm.slane %v1847, 1
        %v2046 = vperm.slane %v1847, 2
        %v2047 = vperm.slane %v1847, 3
        %v2048 = vperm.slane %v1847, 4
        %v2049 = vperm.slane %v1847, 5
        %v2050 = vperm.slane %v1847, 6
        %v2051 = vperm.slane %v1847, 7
        %v2052 = vperm.slane %v1848, 0
        %v2053 = vperm.slane %v1848, 1
        %v2054 = vperm.slane %v1848, 2
        %v2055 = vperm.slane %v1848, 3
        %v2056 = vperm.slane %v1848, 4
        %v2057 = vperm.slane %v1848, 5
        %v2058 = vperm.slane %v1848, 6
        %v2059 = vperm.slane %v1848, 7
        %v2060 = vperm.slane %v1849, 0
        %v2061 = vperm.slane %v1849, 1
        %v2062 = vperm.slane %v1849, 2
        %v2063 = vperm.slane %v1849, 3
        %v2064 = vperm.slane %v1849, 4
        %v2065 = vperm.slane %v1849, 5
        %v2066 = vperm.slane %v1849, 6
        %v2067 = vperm.slane %v1849, 7
        %v2068 = vperm.slane %v1850, 0
        %v2069 = vperm.slane %v1850, 1
        %v2070 = vperm.slane %v1850, 2
        %v2071 = vperm.slane %v1850, 3
        %v2072 = vperm.slane %v1850, 4
        %v2073 = vperm.slane %v1850, 5
        %v2074 = vperm.slane %v1850, 6
        %v2075 = vperm.slane %v1850, 7
        %v2076 = vperm.slane %v1851, 0
        %v2077 = vperm.slane %v1851, 1
        %v2078 = vperm.slane %v1851, 2
        %v2079 = vperm.slane %v1851, 3
        %v2080 = vperm.slane %v1851, 4
        %v2081 = vperm.slane %v1851, 5
        %v2082 = vperm.slane %v1851, 6
        %v2083 = vperm.slane %v1851, 7
        %v2084 = vperm.slane %v1852, 0
        %v2085 = vperm.slane %v1852, 1
        %v2086 = vperm.slane %v1852, 2
        %v2087 = vperm.slane %v1852, 3
        %v2088 = vperm.slane %v1852, 4
        %v2089 = vperm.slane %v1852, 5
        %v2090 = vperm.slane %v1852, 6
        %v2091 = vperm.slane %v1852, 7
        %v2092 = vperm.slane %v1853, 0
        %v2093 = vperm.slane %v1853, 1
        %v2094 = vperm.slane %v1853, 2
        %v2095 = vperm.slane %v1853, 3
        %v2096 = vperm.slane %v1853, 4
        %v2097 = vperm.slane %v1853, 5
        %v2098 = vperm.slane %v1853, 6
        %v2099 = vperm.slane %v1853, 7
        %v2100 = vperm.slane %v1854, 0
        %v2101 = vperm.slane %v1854, 1
        %v2102 = vperm.slane %v1854, 2
        %v2103 = vperm.slane %v1854, 3
        %v2104 = vperm.slane %v1854, 4
        %v2105 = vperm.slane %v1854, 5
        %v2106 = vperm.slane %v1854, 6
        %v2107 = vperm.slane %v1854, 7
        %v2108 = vperm.slane %v1855, 0
        %v2109 = vperm.slane %v1855, 1
        %v2110 = vperm.slane %v1855, 2
        %v2111 = vperm.slane %v1855, 3
        %v2112 = vperm.slane %v1855, 4
        %v2113 = vperm.slane %v1855, 5
        %v2114 = vperm.slane %v1855, 6
        %v2115 = vperm.slane %v1855, 7
        %v2116 = vperm.slane %v1856, 0
        %v2117 = vperm.slane %v1856, 1
        %v2118 = vperm.slane %v1856, 2
        %v2119 = vperm.slane %v1856, 3
        %v2120 = vperm.slane %v1856, 4
        %v2121 = vperm.slane %v1856, 5
        %v2122 = vperm.slane %v1856, 6
        %v2123 = vperm.slane %v1856, 7
        %v2124 = vperm.slane %v1857, 0
        %v2125 = vperm.slane %v1857, 1
        %v2126 = vperm.slane %v1857, 2
        %v2127 = vperm.slane %v1857, 3
        %v2128 = vperm.slane %v1857, 4
        %v2129 = vperm.slane %v1857, 5
        %v2130 = vperm.slane %v1857, 6
        %v2131 = vperm.slane %v1857, 7
        %v2132 = vperm.slane %v1858, 0
        %v2133 = vperm.slane %v1858, 1
        %v2134 = vperm.slane %v1858, 2
        %v2135 = vperm.slane %v1858, 3
        %v2136 = vperm.slane %v1858, 4
        %v2137 = vperm.slane %v1858, 5
        %v2138 = vperm.slane %v1858, 6
        %v2139 = vperm.slane %v1858, 7
        %v2140 = vperm.slane %v1859, 0
        %v2141 = vperm.slane %v1859, 1
        %v2142 = vperm.slane %v1859, 2
        %v2143 = vperm.slane %v1859, 3
        %v2144 = vperm.slane %v1859, 4
        %v2145 = vperm.slane %v1859, 5
        %v2146 = vperm.slane %v1859, 6
        %v2147 = vperm.slane %v1859, 7
        %2148 = vst [vmem:[#allocation1] ss:$9 sm:$0xff] %v1892
        %s2149 = scalar_lea.vmem [#allocation1], 1
        %2150 = vst [vmem:[%s2149] ss:$9 sm:$0xff] %v1893
        %s2151 = scalar_lea.vmem [#allocation1], 2
        %2152 = vst [vmem:[%s2151] ss:$9 sm:$0xff] %v1894
        %s2153 = scalar_lea.vmem [#allocation1], 3
        %2154 = vst [vmem:[%s2153] ss:$9 sm:$0xff] %v1895
        %s2155 = scalar_lea.vmem [#allocation1], 4
        %2156 = vst [vmem:[%s2155] ss:$9 sm:$0xff] %v1896
        %s2157 = scalar_lea.vmem [#allocation1], 5
        %2158 = vst [vmem:[%s2157] ss:$9 sm:$0xff] %v1897
        %s2159 = scalar_lea.vmem [#allocation1], 6
        %2160 = vst [vmem:[%s2159] ss:$9 sm:$0xff] %v1898
        %s2161 = scalar_lea.vmem [#allocation1], 7
        %2162 = vst [vmem:[%s2161] ss:$9 sm:$0xff] %v1899
        %v2163 = vld [vmem:[#allocation1] sm:$0xff]
        %2164 = vst [vmem:[#allocation1] ss:$9 sm:$0xff] %v1900
        %2165 = vst [vmem:[%s2149] ss:$9 sm:$0xff] %v1901
        %2166 = vst [vmem:[%s2151] ss:$9 sm:$0xff] %v1902
        %2167 = vst [vmem:[%s2153] ss:$9 sm:$0xff] %v1903
        %2168 = vst [vmem:[%s2155] ss:$9 sm:$0xff] %v1904
        %2169 = vst [vmem:[%s2157] ss:$9 sm:$0xff] %v1905
        %2170 = vst [vmem:[%s2159] ss:$9 sm:$0xff] %v1906
        %2171 = vst [vmem:[%s2161] ss:$9 sm:$0xff] %v1907
        %v2172 = vld [vmem:[#allocation1] sm:$0xff]
        %2173 = vst [vmem:[#allocation1] ss:$9 sm:$0xff] %v1908
        %2174 = vst [vmem:[%s2149] ss:$9 sm:$0xff] %v1909
        %2175 = vst [vmem:[%s2151] ss:$9 sm:$0xff] %v1910
        %2176 = vst [vmem:[%s2153] ss:$9 sm:$0xff] %v1911
        %2177 = vst [vmem:[%s2155] ss:$9 sm:$0xff] %v1912
        %2178 = vst [vmem:[%s2157] ss:$9 sm:$0xff] %v1913
        %2179 = vst [vmem:[%s2159] ss:$9 sm:$0xff] %v1914
        %2180 = vst [vmem:[%s2161] ss:$9 sm:$0xff] %v1915
        %v2181 = vld [vmem:[#allocation1] sm:$0xff]
        %2182 = vst [vmem:[#allocation1] ss:$9 sm:$0xff] %v1916
        %2183 = vst [vmem:[%s2149] ss:$9 sm:$0xff] %v1917
        %2184 = vst [vmem:[%s2151] ss:$9 sm:$0xff] %v1918
        %2185 = vst [vmem:[%s2153] ss:$9 sm:$0xff] %v1919
        %2186 = vst [vmem:[%s2155] ss:$9 sm:$0xff] %v1920
        %2187 = vst [vmem:[%s2157] ss:$9 sm:$0xff] %v1921
        %2188 = vst [vmem:[%s2159] ss:$9 sm:$0xff] %v1922
        %2189 = vst [vmem:[%s2161] ss:$9 sm:$0xff] %v1923
        %v2190 = vld [vmem:[#allocation1] sm:$0xff]
        %2191 = vst [vmem:[#allocation1] ss:$9 sm:$0xff] %v1924
        %2192 = vst [vmem:[%s2149] ss:$9 sm:$0xff] %v1925
        %2193 = vst [vmem:[%s2151] ss:$9 sm:$0xff] %v1926
        %2194 = vst [vmem:[%s2153] ss:$9 sm:$0xff] %v1927
        %2195 = vst [vmem:[%s2155] ss:$9 sm:$0xff] %v1928
        %2196 = vst [vmem:[%s2157] ss:$9 sm:$0xff] %v1929
        %2197 = vst [vmem:[%s2159] ss:$9 sm:$0xff] %v1930
        %2198 = vst [vmem:[%s2161] ss:$9 sm:$0xff] %v1931
        %v2199 = vld [vmem:[#allocation1] sm:$0xff]
        %2200 = vst [vmem:[#allocation1] ss:$9 sm:$0xff] %v1932
        %2201 = vst [vmem:[%s2149] ss:$9 sm:$0xff] %v1933
        %2202 = vst [vmem:[%s2151] ss:$9 sm:$0xff] %v1934
        %2203 = vst [vmem:[%s2153] ss:$9 sm:$0xff] %v1935
        %2204 = vst [vmem:[%s2155] ss:$9 sm:$0xff] %v1936
        %2205 = vst [vmem:[%s2157] ss:$9 sm:$0xff] %v1937
        %2206 = vst [vmem:[%s2159] ss:$9 sm:$0xff] %v1938
        %2207 = vst [vmem:[%s2161] ss:$9 sm:$0xff] %v1939
        %v2208 = vld [vmem:[#allocation1] sm:$0xff]
        %2209 = vst [vmem:[#allocation1] ss:$9 sm:$0xff] %v1940
        %2210 = vst [vmem:[%s2149] ss:$9 sm:$0xff] %v1941
        %2211 = vst [vmem:[%s2151] ss:$9 sm:$0xff] %v1942
        %2212 = vst [vmem:[%s2153] ss:$9 sm:$0xff] %v1943
        %2213 = vst [vmem:[%s2155] ss:$9 sm:$0xff] %v1944
        %2214 = vst [vmem:[%s2157] ss:$9 sm:$0xff] %v1945
        %2215 = vst [vmem:[%s2159] ss:$9 sm:$0xff] %v1946
        %2216 = vst [vmem:[%s2161] ss:$9 sm:$0xff] %v1947
        %v2217 = vld [vmem:[#allocation1] sm:$0xff]
        %2218 = vst [vmem:[#allocation1] ss:$9 sm:$0xff] %v1948
        %2219 = vst [vmem:[%s2149] ss:$9 sm:$0xff] %v1949
        %2220 = vst [vmem:[%s2151] ss:$9 sm:$0xff] %v1950
        %2221 = vst [vmem:[%s2153] ss:$9 sm:$0xff] %v1951
        %2222 = vst [vmem:[%s2155] ss:$9 sm:$0xff] %v1952
        %2223 = vst [vmem:[%s2157] ss:$9 sm:$0xff] %v1953
        %2224 = vst [vmem:[%s2159] ss:$9 sm:$0xff] %v1954
        %2225 = vst [vmem:[%s2161] ss:$9 sm:$0xff] %v1955
        %v2226 = vld [vmem:[#allocation1] sm:$0xff]
        %2227 = vst [vmem:[#allocation1] ss:$9 sm:$0xff] %v1956
        %2228 = vst [vmem:[%s2149] ss:$9 sm:$0xff] %v1957
        %2229 = vst [vmem:[%s2151] ss:$9 sm:$0xff] %v1958
        %2230 = vst [vmem:[%s2153] ss:$9 sm:$0xff] %v1959
        %2231 = vst [vmem:[%s2155] ss:$9 sm:$0xff] %v1960
        %2232 = vst [vmem:[%s2157] ss:$9 sm:$0xff] %v1961
        %2233 = vst [vmem:[%s2159] ss:$9 sm:$0xff] %v1962
        %2234 = vst [vmem:[%s2161] ss:$9 sm:$0xff] %v1963
        %v2235 = vld [vmem:[#allocation1] sm:$0xff]
        %2236 = vst [vmem:[#allocation1] ss:$9 sm:$0xff] %v1964
        %2237 = vst [vmem:[%s2149] ss:$9 sm:$0xff] %v1965
        %2238 = vst [vmem:[%s2151] ss:$9 sm:$0xff] %v1966
        %2239 = vst [vmem:[%s2153] ss:$9 sm:$0xff] %v1967
        %2240 = vst [vmem:[%s2155] ss:$9 sm:$0xff] %v1968
        %2241 = vst [vmem:[%s2157] ss:$9 sm:$0xff] %v1969
        %2242 = vst [vmem:[%s2159] ss:$9 sm:$0xff] %v1970
        %2243 = vst [vmem:[%s2161] ss:$9 sm:$0xff] %v1971
        %v2244 = vld [vmem:[#allocation1] sm:$0xff]
        %2245 = vst [vmem:[#allocation1] ss:$9 sm:$0xff] %v1972
        %2246 = vst [vmem:[%s2149] ss:$9 sm:$0xff] %v1973
        %2247 = vst [vmem:[%s2151] ss:$9 sm:$0xff] %v1974
        %2248 = vst [vmem:[%s2153] ss:$9 sm:$0xff] %v1975
        %2249 = vst [vmem:[%s2155] ss:$9 sm:$0xff] %v1976
        %2250 = vst [vmem:[%s2157] ss:$9 sm:$0xff] %v1977
        %2251 = vst [vmem:[%s2159] ss:$9 sm:$0xff] %v1978
        %2252 = vst [vmem:[%s2161] ss:$9 sm:$0xff] %v1979
        %v2253 = vld [vmem:[#allocation1] sm:$0xff]
        %2254 = vst [vmem:[#allocation1] ss:$9 sm:$0xff] %v1980
        %2255 = vst [vmem:[%s2149] ss:$9 sm:$0xff] %v1981
        %2256 = vst [vmem:[%s2151] ss:$9 sm:$0xff] %v1982
        %2257 = vst [vmem:[%s2153] ss:$9 sm:$0xff] %v1983
        %2258 = vst [vmem:[%s2155] ss:$9 sm:$0xff] %v1984
        %2259 = vst [vmem:[%s2157] ss:$9 sm:$0xff] %v1985
        %2260 = vst [vmem:[%s2159] ss:$9 sm:$0xff] %v1986
        %2261 = vst [vmem:[%s2161] ss:$9 sm:$0xff] %v1987
        %v2262 = vld [vmem:[#allocation1] sm:$0xff]
        %2263 = vst [vmem:[#allocation1] ss:$9 sm:$0xff] %v1988
        %2264 = vst [vmem:[%s2149] ss:$9 sm:$0xff] %v1989
        %2265 = vst [vmem:[%s2151] ss:$9 sm:$0xff] %v1990
        %2266 = vst [vmem:[%s2153] ss:$9 sm:$0xff] %v1991
        %2267 = vst [vmem:[%s2155] ss:$9 sm:$0xff] %v1992
        %2268 = vst [vmem:[%s2157] ss:$9 sm:$0xff] %v1993
        %2269 = vst [vmem:[%s2159] ss:$9 sm:$0xff] %v1994
        %2270 = vst [vmem:[%s2161] ss:$9 sm:$0xff] %v1995
        %v2271 = vld [vmem:[#allocation1] sm:$0xff]
        %2272 = vst [vmem:[#allocation1] ss:$9 sm:$0xff] %v1996
        %2273 = vst [vmem:[%s2149] ss:$9 sm:$0xff] %v1997
        %2274 = vst [vmem:[%s2151] ss:$9 sm:$0xff] %v1998
        %2275 = vst [vmem:[%s2153] ss:$9 sm:$0xff] %v1999
        %2276 = vst [vmem:[%s2155] ss:$9 sm:$0xff] %v2000
        %2277 = vst [vmem:[%s2157] ss:$9 sm:$0xff] %v2001
        %2278 = vst [vmem:[%s2159] ss:$9 sm:$0xff] %v2002
        %2279 = vst [vmem:[%s2161] ss:$9 sm:$0xff] %v2003
        %v2280 = vld [vmem:[#allocation1] sm:$0xff]
        %2281 = vst [vmem:[#allocation1] ss:$9 sm:$0xff] %v2004
        %2282 = vst [vmem:[%s2149] ss:$9 sm:$0xff] %v2005
        %2283 = vst [vmem:[%s2151] ss:$9 sm:$0xff] %v2006
        %2284 = vst [vmem:[%s2153] ss:$9 sm:$0xff] %v2007
        %2285 = vst [vmem:[%s2155] ss:$9 sm:$0xff] %v2008
        %2286 = vst [vmem:[%s2157] ss:$9 sm:$0xff] %v2009
        %2287 = vst [vmem:[%s2159] ss:$9 sm:$0xff] %v2010
        %2288 = vst [vmem:[%s2161] ss:$9 sm:$0xff] %v2011
        %v2289 = vld [vmem:[#allocation1] sm:$0xff]
        %2290 = vst [vmem:[#allocation1] ss:$9 sm:$0xff] %v2012
        %2291 = vst [vmem:[%s2149] ss:$9 sm:$0xff] %v2013
        %2292 = vst [vmem:[%s2151] ss:$9 sm:$0xff] %v2014
        %2293 = vst [vmem:[%s2153] ss:$9 sm:$0xff] %v2015
        %2294 = vst [vmem:[%s2155] ss:$9 sm:$0xff] %v2016
        %2295 = vst [vmem:[%s2157] ss:$9 sm:$0xff] %v2017
        %2296 = vst [vmem:[%s2159] ss:$9 sm:$0xff] %v2018
        %2297 = vst [vmem:[%s2161] ss:$9 sm:$0xff] %v2019
        %v2298 = vld [vmem:[#allocation1] sm:$0xff]
        %2299 = vst [vmem:[#allocation1] ss:$9 sm:$0xff] %v2020
        %2300 = vst [vmem:[%s2149] ss:$9 sm:$0xff] %v2021
        %2301 = vst [vmem:[%s2151] ss:$9 sm:$0xff] %v2022
        %2302 = vst [vmem:[%s2153] ss:$9 sm:$0xff] %v2023
        %2303 = vst [vmem:[%s2155] ss:$9 sm:$0xff] %v2024
        %2304 = vst [vmem:[%s2157] ss:$9 sm:$0xff] %v2025
        %2305 = vst [vmem:[%s2159] ss:$9 sm:$0xff] %v2026
        %2306 = vst [vmem:[%s2161] ss:$9 sm:$0xff] %v2027
        %v2307 = vld [vmem:[#allocation1] sm:$0xff]
        %2308 = vst [vmem:[#allocation1] ss:$9 sm:$0xff] %v2028
        %2309 = vst [vmem:[%s2149] ss:$9 sm:$0xff] %v2029
        %2310 = vst [vmem:[%s2151] ss:$9 sm:$0xff] %v2030
        %2311 = vst [vmem:[%s2153] ss:$9 sm:$0xff] %v2031
        %2312 = vst [vmem:[%s2155] ss:$9 sm:$0xff] %v2032
        %2313 = vst [vmem:[%s2157] ss:$9 sm:$0xff] %v2033
        %2314 = vst [vmem:[%s2159] ss:$9 sm:$0xff] %v2034
        %2315 = vst [vmem:[%s2161] ss:$9 sm:$0xff] %v2035
        %v2316 = vld [vmem:[#allocation1] sm:$0xff]
        %2317 = vst [vmem:[#allocation1] ss:$9 sm:$0xff] %v2036
        %2318 = vst [vmem:[%s2149] ss:$9 sm:$0xff] %v2037
        %2319 = vst [vmem:[%s2151] ss:$9 sm:$0xff] %v2038
        %2320 = vst [vmem:[%s2153] ss:$9 sm:$0xff] %v2039
        %2321 = vst [vmem:[%s2155] ss:$9 sm:$0xff] %v2040
        %2322 = vst [vmem:[%s2157] ss:$9 sm:$0xff] %v2041
        %2323 = vst [vmem:[%s2159] ss:$9 sm:$0xff] %v2042
        %2324 = vst [vmem:[%s2161] ss:$9 sm:$0xff] %v2043
        %v2325 = vld [vmem:[#allocation1] sm:$0xff]
        %2326 = vst [vmem:[#allocation1] ss:$9 sm:$0xff] %v2044
        %2327 = vst [vmem:[%s2149] ss:$9 sm:$0xff] %v2045
        %2328 = vst [vmem:[%s2151] ss:$9 sm:$0xff] %v2046
        %2329 = vst [vmem:[%s2153] ss:$9 sm:$0xff] %v2047
        %2330 = vst [vmem:[%s2155] ss:$9 sm:$0xff] %v2048
        %2331 = vst [vmem:[%s2157] ss:$9 sm:$0xff] %v2049
        %2332 = vst [vmem:[%s2159] ss:$9 sm:$0xff] %v2050
        %2333 = vst [vmem:[%s2161] ss:$9 sm:$0xff] %v2051
        %v2334 = vld [vmem:[#allocation1] sm:$0xff]
        %2335 = vst [vmem:[#allocation1] ss:$9 sm:$0xff] %v2052
        %2336 = vst [vmem:[%s2149] ss:$9 sm:$0xff] %v2053
        %2337 = vst [vmem:[%s2151] ss:$9 sm:$0xff] %v2054
        %2338 = vst [vmem:[%s2153] ss:$9 sm:$0xff] %v2055
        %2339 = vst [vmem:[%s2155] ss:$9 sm:$0xff] %v2056
        %2340 = vst [vmem:[%s2157] ss:$9 sm:$0xff] %v2057
        %2341 = vst [vmem:[%s2159] ss:$9 sm:$0xff] %v2058
        %2342 = vst [vmem:[%s2161] ss:$9 sm:$0xff] %v2059
        %v2343 = vld [vmem:[#allocation1] sm:$0xff]
        %2344 = vst [vmem:[#allocation1] ss:$9 sm:$0xff] %v2060
        %2345 = vst [vmem:[%s2149] ss:$9 sm:$0xff] %v2061
        %2346 = vst [vmem:[%s2151] ss:$9 sm:$0xff] %v2062
        %2347 = vst [vmem:[%s2153] ss:$9 sm:$0xff] %v2063
        %2348 = vst [vmem:[%s2155] ss:$9 sm:$0xff] %v2064
        %2349 = vst [vmem:[%s2157] ss:$9 sm:$0xff] %v2065
        %2350 = vst [vmem:[%s2159] ss:$9 sm:$0xff] %v2066
        %2351 = vst [vmem:[%s2161] ss:$9 sm:$0xff] %v2067
        %v2352 = vld [vmem:[#allocation1] sm:$0xff]
        %2353 = vst [vmem:[#allocation1] ss:$9 sm:$0xff] %v2068
        %2354 = vst [vmem:[%s2149] ss:$9 sm:$0xff] %v2069
        %2355 = vst [vmem:[%s2151] ss:$9 sm:$0xff] %v2070
        %2356 = vst [vmem:[%s2153] ss:$9 sm:$0xff] %v2071
        %2357 = vst [vmem:[%s2155] ss:$9 sm:$0xff] %v2072
        %2358 = vst [vmem:[%s2157] ss:$9 sm:$0xff] %v2073
        %2359 = vst [vmem:[%s2159] ss:$9 sm:$0xff] %v2074
        %2360 = vst [vmem:[%s2161] ss:$9 sm:$0xff] %v2075
        %v2361 = vld [vmem:[#allocation1] sm:$0xff]
        %2362 = vst [vmem:[#allocation1] ss:$9 sm:$0xff] %v2076
        %2363 = vst [vmem:[%s2149] ss:$9 sm:$0xff] %v2077
        %2364 = vst [vmem:[%s2151] ss:$9 sm:$0xff] %v2078
        %2365 = vst [vmem:[%s2153] ss:$9 sm:$0xff] %v2079
        %2366 = vst [vmem:[%s2155] ss:$9 sm:$0xff] %v2080
        %2367 = vst [vmem:[%s2157] ss:$9 sm:$0xff] %v2081
        %2368 = vst [vmem:[%s2159] ss:$9 sm:$0xff] %v2082
        %2369 = vst [vmem:[%s2161] ss:$9 sm:$0xff] %v2083
        %v2370 = vld [vmem:[#allocation1] sm:$0xff]
        %2371 = vst [vmem:[#allocation1] ss:$9 sm:$0xff] %v2084
        %2372 = vst [vmem:[%s2149] ss:$9 sm:$0xff] %v2085
        %2373 = vst [vmem:[%s2151] ss:$9 sm:$0xff] %v2086
        %2374 = vst [vmem:[%s2153] ss:$9 sm:$0xff] %v2087
        %2375 = vst [vmem:[%s2155] ss:$9 sm:$0xff] %v2088
        %2376 = vst [vmem:[%s2157] ss:$9 sm:$0xff] %v2089
        %2377 = vst [vmem:[%s2159] ss:$9 sm:$0xff] %v2090
        %2378 = vst [vmem:[%s2161] ss:$9 sm:$0xff] %v2091
        %v2379 = vld [vmem:[#allocation1] sm:$0xff]
        %2380 = vst [vmem:[#allocation1] ss:$9 sm:$0xff] %v2092
        %2381 = vst [vmem:[%s2149] ss:$9 sm:$0xff] %v2093
        %2382 = vst [vmem:[%s2151] ss:$9 sm:$0xff] %v2094
        %2383 = vst [vmem:[%s2153] ss:$9 sm:$0xff] %v2095
        %2384 = vst [vmem:[%s2155] ss:$9 sm:$0xff] %v2096
        %2385 = vst [vmem:[%s2157] ss:$9 sm:$0xff] %v2097
        %2386 = vst [vmem:[%s2159] ss:$9 sm:$0xff] %v2098
        %2387 = vst [vmem:[%s2161] ss:$9 sm:$0xff] %v2099
        %v2388 = vld [vmem:[#allocation1] sm:$0xff]
        %2389 = vst [vmem:[#allocation1] ss:$9 sm:$0xff] %v2100
        %2390 = vst [vmem:[%s2149] ss:$9 sm:$0xff] %v2101
        %2391 = vst [vmem:[%s2151] ss:$9 sm:$0xff] %v2102
        %2392 = vst [vmem:[%s2153] ss:$9 sm:$0xff] %v2103
        %2393 = vst [vmem:[%s2155] ss:$9 sm:$0xff] %v2104
        %2394 = vst [vmem:[%s2157] ss:$9 sm:$0xff] %v2105
        %2395 = vst [vmem:[%s2159] ss:$9 sm:$0xff] %v2106
        %2396 = vst [vmem:[%s2161] ss:$9 sm:$0xff] %v2107
        %v2397 = vld [vmem:[#allocation1] sm:$0xff]
        %2398 = vst [vmem:[#allocation1] ss:$9 sm:$0xff] %v2108
        %2399 = vst [vmem:[%s2149] ss:$9 sm:$0xff] %v2109
        %2400 = vst [vmem:[%s2151] ss:$9 sm:$0xff] %v2110
        %2401 = vst [vmem:[%s2153] ss:$9 sm:$0xff] %v2111
        %2402 = vst [vmem:[%s2155] ss:$9 sm:$0xff] %v2112
        %2403 = vst [vmem:[%s2157] ss:$9 sm:$0xff] %v2113
        %2404 = vst [vmem:[%s2159] ss:$9 sm:$0xff] %v2114
        %2405 = vst [vmem:[%s2161] ss:$9 sm:$0xff] %v2115
        %v2406 = vld [vmem:[#allocation1] sm:$0xff]
        %2407 = vst [vmem:[#allocation1] ss:$9 sm:$0xff] %v2116
        %2408 = vst [vmem:[%s2149] ss:$9 sm:$0xff] %v2117
        %2409 = vst [vmem:[%s2151] ss:$9 sm:$0xff] %v2118
        %2410 = vst [vmem:[%s2153] ss:$9 sm:$0xff] %v2119
        %2411 = vst [vmem:[%s2155] ss:$9 sm:$0xff] %v2120
        %2412 = vst [vmem:[%s2157] ss:$9 sm:$0xff] %v2121
        %2413 = vst [vmem:[%s2159] ss:$9 sm:$0xff] %v2122
        %2414 = vst [vmem:[%s2161] ss:$9 sm:$0xff] %v2123
        %v2415 = vld [vmem:[#allocation1] sm:$0xff]
        %2416 = vst [vmem:[#allocation1] ss:$9 sm:$0xff] %v2124
        %2417 = vst [vmem:[%s2149] ss:$9 sm:$0xff] %v2125
        %2418 = vst [vmem:[%s2151] ss:$9 sm:$0xff] %v2126
        %2419 = vst [vmem:[%s2153] ss:$9 sm:$0xff] %v2127
        %2420 = vst [vmem:[%s2155] ss:$9 sm:$0xff] %v2128
        %2421 = vst [vmem:[%s2157] ss:$9 sm:$0xff] %v2129
        %2422 = vst [vmem:[%s2159] ss:$9 sm:$0xff] %v2130
        %2423 = vst [vmem:[%s2161] ss:$9 sm:$0xff] %v2131
        %v2424 = vld [vmem:[#allocation1] sm:$0xff]
        %2425 = vst [vmem:[#allocation1] ss:$9 sm:$0xff] %v2132
        %2426 = vst [vmem:[%s2149] ss:$9 sm:$0xff] %v2133
        %2427 = vst [vmem:[%s2151] ss:$9 sm:$0xff] %v2134
        %2428 = vst [vmem:[%s2153] ss:$9 sm:$0xff] %v2135
        %2429 = vst [vmem:[%s2155] ss:$9 sm:$0xff] %v2136
        %2430 = vst [vmem:[%s2157] ss:$9 sm:$0xff] %v2137
        %2431 = vst [vmem:[%s2159] ss:$9 sm:$0xff] %v2138
        %2432 = vst [vmem:[%s2161] ss:$9 sm:$0xff] %v2139
        %v2433 = vld [vmem:[#allocation1] sm:$0xff]
        %2434 = vst [vmem:[#allocation1] ss:$9 sm:$0xff] %v2140
        %2435 = vst [vmem:[%s2149] ss:$9 sm:$0xff] %v2141
        %2436 = vst [vmem:[%s2151] ss:$9 sm:$0xff] %v2142
        %2437 = vst [vmem:[%s2153] ss:$9 sm:$0xff] %v2143
        %2438 = vst [vmem:[%s2155] ss:$9 sm:$0xff] %v2144
        %2439 = vst [vmem:[%s2157] ss:$9 sm:$0xff] %v2145
        %2440 = vst [vmem:[%s2159] ss:$9 sm:$0xff] %v2146
        %2441 = vst [vmem:[%s2161] ss:$9 sm:$0xff] %v2147
        %v2442 = vld [vmem:[#allocation1] sm:$0xff]
        %2443 = vset.pattern.permute.xlu0 0
        %2444 = vperm.xlu0 %2443, %v2163
        %v2445 = vpop.permute.xlu0 %2444
        %2446 = vset.pattern.permute.xlu0 0
        %2447 = vperm.xlu0 %2446, %v2172
        %v2448 = vpop.permute.xlu0 %2447
        %2449 = vset.pattern.permute.xlu0 0
        %2450 = vperm.xlu0 %2449, %v2181
        %v2451 = vpop.permute.xlu0 %2450
        %2452 = vset.pattern.permute.xlu0 0
        %2453 = vperm.xlu0 %2452, %v2190
        %v2454 = vpop.permute.xlu0 %2453
        %2455 = vset.pattern.permute.xlu0 0
        %2456 = vperm.xlu0 %2455, %v2199
        %v2457 = vpop.permute.xlu0 %2456
        %2458 = vset.pattern.permute.xlu0 0
        %2459 = vperm.xlu0 %2458, %v2208
        %v2460 = vpop.permute.xlu0 %2459
        %2461 = vset.pattern.permute.xlu0 0
        %2462 = vperm.xlu0 %2461, %v2217
        %v2463 = vpop.permute.xlu0 %2462
        %2464 = vset.pattern.permute.xlu0 0
        %2465 = vperm.xlu0 %2464, %v2226
        %v2466 = vpop.permute.xlu0 %2465
        %2467 = vset.pattern.permute.xlu0 0
        %2468 = vperm.xlu0 %2467, %v2235
        %v2469 = vpop.permute.xlu0 %2468
        %2470 = vset.pattern.permute.xlu0 0
        %2471 = vperm.xlu0 %2470, %v2244
        %v2472 = vpop.permute.xlu0 %2471
        %2473 = vset.pattern.permute.xlu0 0
        %2474 = vperm.xlu0 %2473, %v2253
        %v2475 = vpop.permute.xlu0 %2474
        %2476 = vset.pattern.permute.xlu0 0
        %2477 = vperm.xlu0 %2476, %v2262
        %v2478 = vpop.permute.xlu0 %2477
        %2479 = vset.pattern.permute.xlu0 0
        %2480 = vperm.xlu0 %2479, %v2271
        %v2481 = vpop.permute.xlu0 %2480
        %2482 = vset.pattern.permute.xlu0 0
        %2483 = vperm.xlu0 %2482, %v2280
        %v2484 = vpop.permute.xlu0 %2483
        %2485 = vset.pattern.permute.xlu0 0
        %2486 = vperm.xlu0 %2485, %v2289
        %v2487 = vpop.permute.xlu0 %2486
        %2488 = vset.pattern.permute.xlu0 0
        %2489 = vperm.xlu0 %2488, %v2298
        %v2490 = vpop.permute.xlu0 %2489
        %2491 = vset.pattern.permute.xlu0 0
        %2492 = vperm.xlu0 %2491, %v2307
        %v2493 = vpop.permute.xlu0 %2492
        %2494 = vset.pattern.permute.xlu0 0
        %2495 = vperm.xlu0 %2494, %v2316
        %v2496 = vpop.permute.xlu0 %2495
        %2497 = vset.pattern.permute.xlu0 0
        %2498 = vperm.xlu0 %2497, %v2325
        %v2499 = vpop.permute.xlu0 %2498
        %2500 = vset.pattern.permute.xlu0 0
        %2501 = vperm.xlu0 %2500, %v2334
        %v2502 = vpop.permute.xlu0 %2501
        %2503 = vset.pattern.permute.xlu0 0
        %2504 = vperm.xlu0 %2503, %v2343
        %v2505 = vpop.permute.xlu0 %2504
        %2506 = vset.pattern.permute.xlu0 0
        %2507 = vperm.xlu0 %2506, %v2352
        %v2508 = vpop.permute.xlu0 %2507
        %2509 = vset.pattern.permute.xlu0 0
        %2510 = vperm.xlu0 %2509, %v2361
        %v2511 = vpop.permute.xlu0 %2510
        %2512 = vset.pattern.permute.xlu0 0
        %2513 = vperm.xlu0 %2512, %v2370
        %v2514 = vpop.permute.xlu0 %2513
        %2515 = vset.pattern.permute.xlu0 0
        %2516 = vperm.xlu0 %2515, %v2379
        %v2517 = vpop.permute.xlu0 %2516
        %2518 = vset.pattern.permute.xlu0 0
        %2519 = vperm.xlu0 %2518, %v2388
        %v2520 = vpop.permute.xlu0 %2519
        %2521 = vset.pattern.permute.xlu0 0
        %2522 = vperm.xlu0 %2521, %v2397
        %v2523 = vpop.permute.xlu0 %2522
        %2524 = vset.pattern.permute.xlu0 0
        %2525 = vperm.xlu0 %2524, %v2406
        %v2526 = vpop.permute.xlu0 %2525
        %2527 = vset.pattern.permute.xlu0 0
        %2528 = vperm.xlu0 %2527, %v2415
        %v2529 = vpop.permute.xlu0 %2528
        %2530 = vset.pattern.permute.xlu0 0
        %2531 = vperm.xlu0 %2530, %v2424
        %v2532 = vpop.permute.xlu0 %2531
        %2533 = vset.pattern.permute.xlu0 0
        %2534 = vperm.xlu0 %2533, %v2433
        %v2535 = vpop.permute.xlu0 %2534
        %2536 = vset.pattern.permute.xlu0 0
        %2537 = vperm.xlu0 %2536, %v2442
        %v2538 = vpop.permute.xlu0 %2537
        %v2539 = vlaneseq
        %v2540 = vand.u32 %v2539, 127
        %v2541 = vperm.slane %v2445, %v2540
        %v2542 = vadd.s32 %v2540, 4294967288
        %v2543 = vperm.slane %v2448, %v2542
        %vm2544 = vcmask 130112
        %v2545 = vsel %vm2544, %v2543, %v2541
        %v2546 = vadd.s32 %v2540, 4294967280
        %v2547 = vperm.slane %v2451, %v2546
        %vm2548 = vcmask 195712
        %v2549 = vsel %vm2548, %v2547, %v2545
        %v2550 = vadd.s32 %v2540, 4294967272
        %v2551 = vperm.slane %v2454, %v2550
        %vm2552 = vcmask 261312
        %v2553 = vsel %vm2552, %v2551, %v2549
        %v2554 = vadd.s32 %v2540, 4294967264
        %v2555 = vperm.slane %v2457, %v2554
        %vm2556 = vcmask 326912
        %v2557 = vsel %vm2556, %v2555, %v2553
        %v2558 = vadd.s32 %v2540, 4294967256
        %v2559 = vperm.slane %v2460, %v2558
        %vm2560 = vcmask 392512
        %v2561 = vsel %vm2560, %v2559, %v2557
        %v2562 = vadd.s32 %v2540, 4294967248
        %v2563 = vperm.slane %v2463, %v2562
        %vm2564 = vcmask 458112
        %v2565 = vsel %vm2564, %v2563, %v2561
        %v2566 = vadd.s32 %v2540, 4294967240
        %v2567 = vperm.slane %v2466, %v2566
        %vm2568 = vcmask 523712
        %v2569 = vsel %vm2568, %v2567, %v2565
        %v2570 = vadd.s32 %v2540, 4294967232
        %v2571 = vperm.slane %v2469, %v2570
        %vm2572 = vcmask 589312
        %v2573 = vsel %vm2572, %v2571, %v2569
        %v2574 = vadd.s32 %v2540, 4294967224
        %v2575 = vperm.slane %v2472, %v2574
        %vm2576 = vcmask 654912
        %v2577 = vsel %vm2576, %v2575, %v2573
        %v2578 = vadd.s32 %v2540, 4294967216
        %v2579 = vperm.slane %v2475, %v2578
        %vm2580 = vcmask 720512
        %v2581 = vsel %vm2580, %v2579, %v2577
        %v2582 = vadd.s32 %v2540, 4294967208
        %v2583 = vperm.slane %v2478, %v2582
        %vm2584 = vcmask 786112
        %v2585 = vsel %vm2584, %v2583, %v2581
        %v2586 = vadd.s32 %v2540, 4294967200
        %v2587 = vperm.slane %v2481, %v2586
        %vm2588 = vcmask 851712
        %v2589 = vsel %vm2588, %v2587, %v2585
        %v2590 = vadd.s32 %v2540, 4294967192
        %v2591 = vperm.slane %v2484, %v2590
        %vm2592 = vcmask 917312
        %v2593 = vsel %vm2592, %v2591, %v2589
        %v2594 = vadd.s32 %v2540, 4294967184
        %v2595 = vperm.slane %v2487, %v2594
        %vm2596 = vcmask 982912
        %v2597 = vsel %vm2596, %v2595, %v2593
        %v2598 = vadd.s32 %v2540, 4294967176
        %v2599 = vperm.slane %v2490, %v2598
        %vm2600 = vcmask 1048512
        %v2601 = vsel %vm2600, %v2599, %v2597
        %v2602 = vperm.slane %v2493, %v2540
        %v2603 = vperm.slane %v2496, %v2542
        %v2604 = vsel %vm2544, %v2603, %v2602
        %v2605 = vperm.slane %v2499, %v2546
        %v2606 = vsel %vm2548, %v2605, %v2604
        %v2607 = vperm.slane %v2502, %v2550
        %v2608 = vsel %vm2552, %v2607, %v2606
        %v2609 = vperm.slane %v2505, %v2554
        %v2610 = vsel %vm2556, %v2609, %v2608
        %v2611 = vperm.slane %v2508, %v2558
        %v2612 = vsel %vm2560, %v2611, %v2610
        %v2613 = vperm.slane %v2511, %v2562
        %v2614 = vsel %vm2564, %v2613, %v2612
        %v2615 = vperm.slane %v2514, %v2566
        %v2616 = vsel %vm2568, %v2615, %v2614
        %v2617 = vperm.slane %v2517, %v2570
        %v2618 = vsel %vm2572, %v2617, %v2616
        %v2619 = vperm.slane %v2520, %v2574
        %v2620 = vsel %vm2576, %v2619, %v2618
        %v2621 = vperm.slane %v2523, %v2578
        %v2622 = vsel %vm2580, %v2621, %v2620
        %v2623 = vperm.slane %v2526, %v2582
        %v2624 = vsel %vm2584, %v2623, %v2622
        %v2625 = vperm.slane %v2529, %v2586
        %v2626 = vsel %vm2588, %v2625, %v2624
        %v2627 = vperm.slane %v2532, %v2590
        %v2628 = vsel %vm2592, %v2627, %v2626
        %v2629 = vperm.slane %v2535, %v2594
        %v2630 = vsel %vm2596, %v2629, %v2628
        %v2631 = vperm.slane %v2538, %v2598
        %v2632 = vsel %vm2600, %v2631, %v2630
        %v2633 = vrot.slane %v2632, 7
        %vm2634 = vcmask 1040384
        %v2635 = vsel %vm2634, %v2601, %v2633
        %v2637 = vlaneseq
        %vm2638 = vcmp.ge.s32.totalorder %v2637, 0
        %vm2639 = vcmp.lt.s32.totalorder %v2637, 256
        %vm2640 = vmand %vm2638, %vm2639
        %2641 = vst.msk [vmem:[%s236] sm:$0x3] %vm2640, %v2635
        %s2642 = sand.u32 %s138, 1
        %s2643 = scalar_lea.sflag [#allocation4], %s2642
        %s2644 = sand.u32 %s138, 1
        %s2645 = smul.addr %s2644, 2
        %s2646 = scalar_lea.vmem [#allocation3], %s2645
        // Predicated region
        $region41: #{_net_forward_impl.1} parent=39 // pred_check
          %p2647 = pneg %p148
        $region42: #{_net_forward_impl.1} parent=39 // pred_check_branch
          %2649 = sbr.rel (%p2647) target = $region44
        $region43: #{_net_forward_impl.1} parent=39 // pred_region
          %s2650 = smul.u32 2, %s20
          %s2651 = ssub.s32 3, %s2650
          %p2652 = scmp.lt.s32.totalorder %s2651, 2
          %s2653 = scalar_select %p2652, %s2651, 2
          %s2654 = ssub.s32 2, %s2653
          %s2655 = sshll.u32 %s2654, 4
          %2656 = vsyncadd %s2643, %s2655
          %p2657 = scmp.ne.s32.totalorder 0, %s2653
          %s2658 = scalar_lea.hbm %s5, %s2650
          %s2659 = sshll.u32 %s2653, 4
          %s2660 = sshll.u32 %s2646, 4
          %s2661 = int_to_ptr.vmem [resolvable:$true] %s2660
          %s2662 = sshll.u32 %s2658, 4
          %s2663 = int_to_ptr.hbm [resolvable:$true] %s2662
          %2665 = dma.vmem_to_hbm [thread:$0]  (%p2657), %s2661, %s2659, %s2663, %s2643
        $region44: #{_net_forward_impl.1} parent=39 // pred_fallthru
          _
      $region40: #{_net_forward_impl.1} parent=5 // pred_fallthru
        _
      %p2666 = scmp.le.s32.totalorder 2, %s15
      // Predicated region
      $region45: #{_net_forward_impl.1} parent=5 // pred_check
        %p2667 = pneg %p2666
      $region46: #{_net_forward_impl.1} parent=5 // pred_check_branch
        %2669 = sbr.rel (%p2667) target = $region48
      $region47: #{_net_forward_impl.1} parent=5 // pred_region
        %s2670 = ssub.s32 %s15, 2
        // Predicated region
        $region49: #{_net_forward_impl.1} parent=47 // pred_check
          %p2671 = pneg %p154
        $region50: #{_net_forward_impl.1} parent=47 // pred_check_branch
          %2673 = sbr.rel (%p2671) target = $region52
        $region51: #{_net_forward_impl.1} parent=47 // pred_region
          %s2674 = sand.u32 %s139, 1
          %s2675 = scalar_lea.sflag [#allocation4], %s2674
          %s2676 = sand.u32 %s139, 1
          %s2677 = smul.addr %s2676, 2
          %s2678 = scalar_lea.vmem [#allocation3], %s2677
          %2680 = dma.done %s2675, 32
        $region52: #{_net_forward_impl.1} parent=47 // pred_fallthru
          _
      $region48: #{_net_forward_impl.1} parent=5 // pred_fallthru
        _
    $region6: #{_net_forward_impl.1} parent=1 // loop_footer
      %s19 = sadd.s32 1, %s15
    $region7: #{_net_forward_impl.1} parent=1 // loop_footer_branch
      %14 = sbr.rel target = $region3
    $region8: #{_net_forward_impl.1} parent=1 // loop_exit
      _
    %2681 = vsyncpa [#allocation4], 1
    %s2682 = scalar_lea.sflag [#allocation4], 1
    %2683 = vsyncpa %s2682, 1

</llo_original>
